<compile_context>
chip_gen: v5e
topology: v5e:2x2
jax: 0.10.0
libtpu: 0.0.40
codegen_flags: <defaults>
</compile_context>

<pallas_src>
import jax
import jax.numpy as jnp
from jax.experimental import pallas as pl
from jax.experimental.pallas import tpu as pltpu

LANE = 128  # TPU lane width; feature dims are padded to a multiple of this.


def _round_up(x, m):
    return ((x + m - 1) // m) * m


def _mlp_kernel(x_ref,
                w1_ref, b1_ref,
                w2_ref, b2_ref,
                w3_ref, b3_ref,
                w4_ref, b4_ref,
                w5_ref, b5_ref,
                o_ref):
    def layer(h, w_ref, b_ref, relu):
        # bf16 x bf16 on the MXU, f32 accumulation, f32 bias add on the VPU.
        y = jnp.dot(h, w_ref[...], preferred_element_type=jnp.float32)
        y = y + b_ref[...]
        if relu:
            # Carry activations in bf16 between layers (halves spill traffic).
            return jnp.maximum(y, 0.0).astype(jnp.bfloat16)
        return y

    h = x_ref[...].astype(jnp.bfloat16)
    h = layer(h, w1_ref, b1_ref, relu=True)    # fc1 + ReLU
    h = layer(h, w2_ref, b2_ref, relu=True)    # fc2 + ReLU
    h = layer(h, w3_ref, b3_ref, relu=True)    # fc3 + ReLU
    h = layer(h, w4_ref, b4_ref, relu=True)    # fc4 + ReLU
    y = layer(h, w5_ref, b5_ref, relu=False)   # fc5 (f32 pre-activation)
    o_ref[...] = jax.nn.sigmoid(y).astype(o_ref.dtype)


def _choose_tiling(batch, tb):
    """Adaptive batch tiling: minimal padding, >=2 grid steps for v7x when
    the batch is big enough to split."""
    steps = pl.cdiv(batch, tb)
    if batch >= 16 and steps == 1:
        steps = 2  # give v7x's second TensorCore work; ~free on v5e/v6e
    tile = _round_up(pl.cdiv(batch, steps), 8)
    padded = tile * steps
    return tile, padded, steps


def net_forward(x, params, *, tb=512, out_dtype=jnp.float32):
    """Forward pass of Net.

    x:      (batch, state_size) float32.
    params: prepared params (see prepare_params): list of 5 (W, b) pairs with
            W (in, out) bf16 (W1 rows / W5 cols padded to LANE) and b (1, out)
            f32 (b5 padded to LANE).
    """
    batch, in_feat = x.shape
    feat_pad = params[0][0].shape[0]     # padded input feature dim (>= in_feat)
    out_pad = params[-1][0].shape[1]     # padded output feature dim

    tile, padded_batch, steps = _choose_tiling(batch, tb)
    pad_rows = padded_batch - batch
    pad_cols = feat_pad - in_feat
    if pad_rows or pad_cols:
        x = jnp.pad(x, ((0, pad_rows), (0, pad_cols)))

    # x / out are tiled over the batch (lane-dense, padded feature dim).
    # Weights & biases use a constant index_map (full-array block) so they are
    # fetched once and stay VMEM-resident across grid steps.
    flat_args = [x]
    in_specs = [pl.BlockSpec((tile, feat_pad), lambda i: (i, 0))]
    for w, b in params:
        flat_args += [w, b]
        in_specs += [
            pl.BlockSpec(w.shape, lambda i: (0, 0)),
            pl.BlockSpec(b.shape, lambda i: (0, 0)),
        ]

    out = pl.pallas_call(
        _mlp_kernel,
        out_shape=jax.ShapeDtypeStruct((padded_batch, out_pad), out_dtype),
        grid=(steps,),
        in_specs=in_specs,
        out_specs=pl.BlockSpec((tile, out_pad), lambda i: (i, 0)),
        compiler_params=pltpu.CompilerParams(
            dimension_semantics=("parallel",),
        ),
    )(*flat_args)

    # Slice off batch padding and the padded feature lanes.
    return out[:batch, :in_feat]


def init_params(state_size, key):
    """PyTorch nn.Linear-equivalent init, stored as (in, out) f32 weights and
    (1, out) f32 biases (forward computes x @ W + b, identical to x @ W.T + b
    with PyTorch's (out, in) storage)."""
    dims = [state_size, 256, 512, 256, 128, state_size]
    params = []
    for i in range(5):
        fan_in, fan_out = dims[i], dims[i + 1]
        key, kw, kb = jax.random.split(key, 3)
        bound = 1.0 / jnp.sqrt(fan_in)
        w = jax.random.uniform(kw, (fan_in, fan_out), jnp.float32, -bound, bound)
        b = jax.random.uniform(kb, (1, fan_out), jnp.float32, -bound, bound)
        params.append((w, b))
    return params


def prepare_params(params, state_size, lane=LANE):
    """One-time prep for the kernel: zero-pad the state dim (W1 rows, W5 cols,
    b5) to the lane width and cast weights to bf16 (MXU native)."""
    feat_pad = _round_up(state_size, lane)
    prepped = []
    last = len(params) - 1
    for i, (w, b) in enumerate(params):
        if i == 0:
            w = jnp.pad(w, ((0, feat_pad - w.shape[0]), (0, 0)))
        if i == last:
            w = jnp.pad(w, ((0, 0), (0, feat_pad - w.shape[1])))
            b = jnp.pad(b, ((0, 0), (0, feat_pad - b.shape[1])))
        prepped.append((w.astype(jnp.bfloat16), b.astype(jnp.float32)))
    return prepped


def net_forward_ref(x, params):
    """Pure-JAX reference with the same bf16-weight / bf16-activation /
    f32-accumulate recipe as the kernel (uses the unpadded f32 params)."""
    h = x.astype(jnp.bfloat16)
    last = len(params) - 1
    for i, (w, b) in enumerate(params):
        y = jnp.dot(h, w.astype(jnp.bfloat16),
                    preferred_element_type=jnp.float32) + b
        if i < last:
            h = jnp.maximum(y, 0.0).astype(jnp.bfloat16)
        else:
            return jax.nn.sigmoid(y)


if __name__ == "__main__":
    key = jax.random.PRNGKey(0)
    state_size = 16

    kx, kp, kx2 = jax.random.split(key, 3)
    raw_params = init_params(state_size, kp)
    params = prepare_params(raw_params, state_size)

    # Small batch (online action selection): single grid step, 8-row tile.
    x_small = jax.random.normal(kx, (8, state_size), jnp.float32)
    out_small = jax.block_until_ready(net_forward(x_small, params))
    ref_small = net_forward_ref(x_small, raw_params)
    assert out_small.shape == (8, state_size)
    assert jnp.allclose(out_small, ref_small, atol=2e-2, rtol=2e-2), \
        "mismatch vs reference (small batch)"

    # Larger batch: exercises adaptive tiling (300 -> 2 x 152-row tiles, only
    # 4 padded rows) and the 2-step parallel grid with VMEM-resident weights.
    x_big = jax.random.normal(kx2, (300, state_size), jnp.float32)
    out_big = jax.block_until_ready(net_forward(x_big, params))
    ref_big = net_forward_ref(x_big, raw_params)
    assert out_big.shape == (300, state_size)
    assert jnp.allclose(out_big, ref_big, atol=2e-2, rtol=2e-2), \
        "mismatch vs reference (large batch)"

    print("KERNEL_OK")
</pallas_src>

<mosaic_0001>
module attributes {stable_mosaic.version = 11 : i64} {
  func.func @_mlp_kernel(%arg0: i32, %arg1: memref<8x128xf32, #tpu.memory_space<vmem>>, %arg2: memref<128x256xbf16, #tpu.memory_space<vmem>>, %arg3: memref<1x256xf32, #tpu.memory_space<vmem>>, %arg4: memref<256x512xbf16, #tpu.memory_space<vmem>>, %arg5: memref<1x512xf32, #tpu.memory_space<vmem>>, %arg6: memref<512x256xbf16, #tpu.memory_space<vmem>>, %arg7: memref<1x256xf32, #tpu.memory_space<vmem>>, %arg8: memref<256x128xbf16, #tpu.memory_space<vmem>>, %arg9: memref<1x128xf32, #tpu.memory_space<vmem>>, %arg10: memref<128x128xbf16, #tpu.memory_space<vmem>>, %arg11: memref<1x128xf32, #tpu.memory_space<vmem>>, %arg12: memref<8x128xf32, #tpu.memory_space<vmem>>) attributes {dimension_semantics = [#tpu.dimension_semantics<parallel>], iteration_bounds = array<i64: 1>, scalar_prefetch = 0 : i64, scratch_operands = 0 : i64, tpu.core_type = #tpu.core_type<tc>, window_params = [{transform_indices = @transform_0, window_bounds = array<i64: 8, 128>}, {pipeline_mode = #tpu.pipeline_mode<synchronous>, transform_indices = @transform_1, window_bounds = array<i64: 128, 256>}, {pipeline_mode = #tpu.pipeline_mode<synchronous>, transform_indices = @transform_2, window_bounds = array<i64: 1, 256>}, {pipeline_mode = #tpu.pipeline_mode<synchronous>, transform_indices = @transform_3, window_bounds = array<i64: 256, 512>}, {pipeline_mode = #tpu.pipeline_mode<synchronous>, transform_indices = @transform_4, window_bounds = array<i64: 1, 512>}, {pipeline_mode = #tpu.pipeline_mode<synchronous>, transform_indices = @transform_5, window_bounds = array<i64: 512, 256>}, {pipeline_mode = #tpu.pipeline_mode<synchronous>, transform_indices = @transform_6, window_bounds = array<i64: 1, 256>}, {pipeline_mode = #tpu.pipeline_mode<synchronous>, transform_indices = @transform_7, window_bounds = array<i64: 256, 128>}, {pipeline_mode = #tpu.pipeline_mode<synchronous>, transform_indices = @transform_8, window_bounds = array<i64: 1, 128>}, {pipeline_mode = #tpu.pipeline_mode<synchronous>, transform_indices = @transform_9, window_bounds = array<i64: 128, 128>}, {pipeline_mode = #tpu.pipeline_mode<synchronous>, transform_indices = @transform_10, window_bounds = array<i64: 1, 128>}, {transform_indices = @transform_11, window_bounds = array<i64: 8, 128>}]} {
    %c0 = arith.constant 0 : index
    %c0_0 = arith.constant 0 : index
    %0 = vector.load %arg1[%c0, %c0_0] : memref<8x128xf32, #tpu.memory_space<vmem>>, vector<8x128xf32>
    %1 = arith.truncf %0 : vector<8x128xf32> to vector<8x128xbf16>
    %c0_1 = arith.constant 0 : index
    %c0_2 = arith.constant 0 : index
    %2 = vector.load %arg2[%c0_1, %c0_2] : memref<128x256xbf16, #tpu.memory_space<vmem>>, vector<128x256xbf16>
    %cst = arith.constant dense<0.000000e+00> : vector<8x256xf32>
    %3 = tpu.matmul %1, %2, %cst {dimension_numbers = #tpu.dot_dimension_numbers<[1], [0], [0], [1], [0, 0, 1, 1], [], []>} : vector<8x128xbf16>, vector<128x256xbf16>, vector<8x256xf32> -> vector<8x256xf32>
    %c0_3 = arith.constant 0 : index
    %c0_4 = arith.constant 0 : index
    %4 = vector.load %arg3[%c0_3, %c0_4] : memref<1x256xf32, #tpu.memory_space<vmem>>, vector<1x256xf32>
    %5 = vector.broadcast %4 : vector<1x256xf32> to vector<8x256xf32>
    %6 = arith.addf %3, %5 : vector<8x256xf32>
    %cst_5 = arith.constant 0.000000e+00 : f32
    %7 = vector.broadcast %cst_5 : f32 to vector<8x256xf32>
    %8 = arith.maximumf %6, %7 : vector<8x256xf32>
    %9 = arith.truncf %8 : vector<8x256xf32> to vector<8x256xbf16>
    %c0_6 = arith.constant 0 : index
    %c0_7 = arith.constant 0 : index
    %10 = vector.load %arg4[%c0_6, %c0_7] : memref<256x512xbf16, #tpu.memory_space<vmem>>, vector<256x512xbf16>
    %cst_8 = arith.constant dense<0.000000e+00> : vector<8x512xf32>
    %11 = tpu.matmul %9, %10, %cst_8 {dimension_numbers = #tpu.dot_dimension_numbers<[1], [0], [0], [1], [0, 0, 1, 1], [], []>} : vector<8x256xbf16>, vector<256x512xbf16>, vector<8x512xf32> -> vector<8x512xf32>
    %c0_9 = arith.constant 0 : index
    %c0_10 = arith.constant 0 : index
    %12 = vector.load %arg5[%c0_9, %c0_10] : memref<1x512xf32, #tpu.memory_space<vmem>>, vector<1x512xf32>
    %13 = vector.broadcast %12 : vector<1x512xf32> to vector<8x512xf32>
    %14 = arith.addf %11, %13 : vector<8x512xf32>
    %cst_11 = arith.constant 0.000000e+00 : f32
    %15 = vector.broadcast %cst_11 : f32 to vector<8x512xf32>
    %16 = arith.maximumf %14, %15 : vector<8x512xf32>
    %17 = arith.truncf %16 : vector<8x512xf32> to vector<8x512xbf16>
    %c0_12 = arith.constant 0 : index
    %c0_13 = arith.constant 0 : index
    %18 = vector.load %arg6[%c0_12, %c0_13] : memref<512x256xbf16, #tpu.memory_space<vmem>>, vector<512x256xbf16>
    %cst_14 = arith.constant dense<0.000000e+00> : vector<8x256xf32>
    %19 = tpu.matmul %17, %18, %cst_14 {dimension_numbers = #tpu.dot_dimension_numbers<[1], [0], [0], [1], [0, 0, 1, 1], [], []>} : vector<8x512xbf16>, vector<512x256xbf16>, vector<8x256xf32> -> vector<8x256xf32>
    %c0_15 = arith.constant 0 : index
    %c0_16 = arith.constant 0 : index
    %20 = vector.load %arg7[%c0_15, %c0_16] : memref<1x256xf32, #tpu.memory_space<vmem>>, vector<1x256xf32>
    %21 = vector.broadcast %20 : vector<1x256xf32> to vector<8x256xf32>
    %22 = arith.addf %19, %21 : vector<8x256xf32>
    %cst_17 = arith.constant 0.000000e+00 : f32
    %23 = vector.broadcast %cst_17 : f32 to vector<8x256xf32>
    %24 = arith.maximumf %22, %23 : vector<8x256xf32>
    %25 = arith.truncf %24 : vector<8x256xf32> to vector<8x256xbf16>
    %c0_18 = arith.constant 0 : index
    %c0_19 = arith.constant 0 : index
    %26 = vector.load %arg8[%c0_18, %c0_19] : memref<256x128xbf16, #tpu.memory_space<vmem>>, vector<256x128xbf16>
    %cst_20 = arith.constant dense<0.000000e+00> : vector<8x128xf32>
    %27 = tpu.matmul %25, %26, %cst_20 {dimension_numbers = #tpu.dot_dimension_numbers<[1], [0], [0], [1], [0, 0, 1, 1], [], []>} : vector<8x256xbf16>, vector<256x128xbf16>, vector<8x128xf32> -> vector<8x128xf32>
    %c0_21 = arith.constant 0 : index
    %c0_22 = arith.constant 0 : index
    %28 = vector.load %arg9[%c0_21, %c0_22] : memref<1x128xf32, #tpu.memory_space<vmem>>, vector<1x128xf32>
    %29 = vector.broadcast %28 : vector<1x128xf32> to vector<8x128xf32>
    %30 = arith.addf %27, %29 : vector<8x128xf32>
    %cst_23 = arith.constant 0.000000e+00 : f32
    %31 = vector.broadcast %cst_23 : f32 to vector<8x128xf32>
    %32 = arith.maximumf %30, %31 : vector<8x128xf32>
    %33 = arith.truncf %32 : vector<8x128xf32> to vector<8x128xbf16>
    %c0_24 = arith.constant 0 : index
    %c0_25 = arith.constant 0 : index
    %34 = vector.load %arg10[%c0_24, %c0_25] : memref<128x128xbf16, #tpu.memory_space<vmem>>, vector<128x128xbf16>
    %cst_26 = arith.constant dense<0.000000e+00> : vector<8x128xf32>
    %35 = tpu.matmul %33, %34, %cst_26 {dimension_numbers = #tpu.dot_dimension_numbers<[1], [0], [0], [1], [0, 0, 1, 1], [], []>} : vector<8x128xbf16>, vector<128x128xbf16>, vector<8x128xf32> -> vector<8x128xf32>
    %c0_27 = arith.constant 0 : index
    %c0_28 = arith.constant 0 : index
    %36 = vector.load %arg11[%c0_27, %c0_28] : memref<1x128xf32, #tpu.memory_space<vmem>>, vector<1x128xf32>
    %37 = vector.broadcast %36 : vector<1x128xf32> to vector<8x128xf32>
    %38 = arith.addf %35, %37 : vector<8x128xf32>
    %39 = arith.negf %38 : vector<8x128xf32>
    %40 = math.exp %39 : vector<8x128xf32>
    %cst_29 = arith.constant 1.000000e+00 : f32
    %41 = vector.broadcast %cst_29 : f32 to vector<8x128xf32>
    %42 = arith.addf %41, %40 : vector<8x128xf32>
    %43 = arith.divf %41, %42 : vector<8x128xf32>
    %c0_30 = arith.constant 0 : index
    %c0_31 = arith.constant 0 : index
    %44 = vector.load %arg12[%c0_30, %c0_31] : memref<8x128xf32, #tpu.memory_space<vmem>>, vector<8x128xf32>
    tpu.vector_store %arg12[%c0_30, %c0_31], %43 {strides = array<i32>} : memref<8x128xf32, #tpu.memory_space<vmem>>, vector<8x128xf32>,
    return
  }
  func.func @transform_0(%arg0: i32) -> (i32, i32) {
    %c0_i32 = arith.constant 0 : i32
    %c0_i32_0 = arith.constant 0 : i32
    return %arg0, %c0_i32 : i32, i32
  }
  func.func @transform_1(%arg0: i32) -> (i32, i32) {
    %c0_i32 = arith.constant 0 : i32
    %c0_i32_0 = arith.constant 0 : i32
    %c0_i32_1 = arith.constant 0 : i32
    return %c0_i32, %c0_i32_0 : i32, i32
  }
  func.func @transform_2(%arg0: i32) -> (i32, i32) {
    %c0_i32 = arith.constant 0 : i32
    %c0_i32_0 = arith.constant 0 : i32
    %c0_i32_1 = arith.constant 0 : i32
    return %c0_i32, %c0_i32_0 : i32, i32
  }
  func.func @transform_3(%arg0: i32) -> (i32, i32) {
    %c0_i32 = arith.constant 0 : i32
    %c0_i32_0 = arith.constant 0 : i32
    %c0_i32_1 = arith.constant 0 : i32
    return %c0_i32, %c0_i32_0 : i32, i32
  }
  func.func @transform_4(%arg0: i32) -> (i32, i32) {
    %c0_i32 = arith.constant 0 : i32
    %c0_i32_0 = arith.constant 0 : i32
    %c0_i32_1 = arith.constant 0 : i32
    return %c0_i32, %c0_i32_0 : i32, i32
  }
  func.func @transform_5(%arg0: i32) -> (i32, i32) {
    %c0_i32 = arith.constant 0 : i32
    %c0_i32_0 = arith.constant 0 : i32
    %c0_i32_1 = arith.constant 0 : i32
    return %c0_i32, %c0_i32_0 : i32, i32
  }
  func.func @transform_6(%arg0: i32) -> (i32, i32) {
    %c0_i32 = arith.constant 0 : i32
    %c0_i32_0 = arith.constant 0 : i32
    %c0_i32_1 = arith.constant 0 : i32
    return %c0_i32, %c0_i32_0 : i32, i32
  }
  func.func @transform_7(%arg0: i32) -> (i32, i32) {
    %c0_i32 = arith.constant 0 : i32
    %c0_i32_0 = arith.constant 0 : i32
    %c0_i32_1 = arith.constant 0 : i32
    return %c0_i32, %c0_i32_0 : i32, i32
  }
  func.func @transform_8(%arg0: i32) -> (i32, i32) {
    %c0_i32 = arith.constant 0 : i32
    %c0_i32_0 = arith.constant 0 : i32
    %c0_i32_1 = arith.constant 0 : i32
    return %c0_i32, %c0_i32_0 : i32, i32
  }
  func.func @transform_9(%arg0: i32) -> (i32, i32) {
    %c0_i32 = arith.constant 0 : i32
    %c0_i32_0 = arith.constant 0 : i32
    %c0_i32_1 = arith.constant 0 : i32
    return %c0_i32, %c0_i32_0 : i32, i32
  }
  func.func @transform_10(%arg0: i32) -> (i32, i32) {
    %c0_i32 = arith.constant 0 : i32
    %c0_i32_0 = arith.constant 0 : i32
    %c0_i32_1 = arith.constant 0 : i32
    return %c0_i32, %c0_i32_0 : i32, i32
  }
  func.func @transform_11(%arg0: i32) -> (i32, i32) {
    %c0_i32 = arith.constant 0 : i32
    %c0_i32_0 = arith.constant 0 : i32
    return %arg0, %c0_i32 : i32, i32
  }
}

</mosaic_0001>

<llo_original>
// kernel: tpu_custom_call.1
$region0: #{tpu_custom_call.1}
  #allocation0 [shape = 'u32[]', space=smem, size = 0x4, offset = 0x4, fixed_abs, tag = 'smem constant byte address 0x4 - core index']
  #allocation1 [shape = 'u32[72,128]{1,0:T(1,128)}', space=vmem, size = 0x9000, scoped, tag = 'internal scratch']
  %s0 = inlined_call_operand.hbm [shape: f32[8,128], index: 0, kind: input, shape index: {}]
  %s1 = inlined_call_operand.hbm [shape: bf16[128,256], index: 1, kind: input, shape index: {}]
  %s2 = inlined_call_operand.hbm [shape: f32[1,256], index: 2, kind: input, shape index: {}]
  %s3 = inlined_call_operand.hbm [shape: bf16[256,512], index: 3, kind: input, shape index: {}]
  %s4 = inlined_call_operand.hbm [shape: f32[1,512], index: 4, kind: input, shape index: {}]
  %s5 = inlined_call_operand.hbm [shape: bf16[512,256], index: 5, kind: input, shape index: {}]
  %s6 = inlined_call_operand.vmem [shape: f32[1,256], index: 6, kind: input, shape index: {}]
  %s7 = inlined_call_operand.hbm [shape: bf16[256,128], index: 7, kind: input, shape index: {}]
  %s8 = inlined_call_operand.vmem [shape: f32[1,128], index: 8, kind: input, shape index: {}]
  %s9 = inlined_call_operand.hbm [shape: bf16[128,128], index: 9, kind: input, shape index: {}]
  %s10 = inlined_call_operand.vmem [shape: f32[1,128], index: 10, kind: input, shape index: {}]
  %s11 = inlined_call_operand.hbm [shape: f32[8,128], index: 11, kind: output, shape index: {}]
  %s12 = sld [smem:[#allocation0]]
  $region86: #{tpu_custom_call.1} parent=0
    _
  %s14 = ssub.s32 1, %s12
  %s15 = scalar_select 0, %s14, %s12
  $region1: #{tpu_custom_call.1} parent=0
    #allocation2 [shape = 'u8[4096]{0}', space=vmem, size = 0x1000, scoped, tag = 'input window, operand 0, single buffered']
    #allocation3 [shape = 's32[1]{0}', space=sflag, size = 0x4, scoped, tag = 'scoped memory for tpu_custom_call.1']
    #allocation4 [shape = 's32[1]{0}', space=sflag, size = 0x4, scoped, tag = 'scoped memory for tpu_custom_call.1']
    #allocation5 [shape = 'u8[65536]{0}', space=vmem, size = 0x10000, scoped, tag = 'input window, operand 1, single buffered']
    #allocation6 [shape = 's32[1]{0}', space=sflag, size = 0x4, scoped, tag = 'scoped memory for tpu_custom_call.1']
    #allocation7 [shape = 'u8[1024]{0}', space=vmem, size = 0x400, scoped, tag = 'input window, operand 2, single buffered']
    #allocation8 [shape = 'u8[262144]{0}', space=vmem, size = 0x40000, scoped, tag = 'input window, operand 3, single buffered']
    #allocation9 [shape = 's32[1]{0}', space=sflag, size = 0x4, scoped, tag = 'scoped memory for tpu_custom_call.1']
    #allocation10 [shape = 'u8[2048]{0}', space=vmem, size = 0x800, scoped, tag = 'input window, operand 4, single buffered']
    #allocation11 [shape = 'u8[262144]{0}', space=vmem, size = 0x40000, scoped, tag = 'input window, operand 5, single buffered']
    #allocation12 [shape = 's32[1]{0}', space=sflag, size = 0x4, scoped, tag = 'scoped memory for tpu_custom_call.1']
    #allocation13 [shape = 'u8[65536]{0}', space=vmem, size = 0x10000, scoped, tag = 'input window, operand 7, single buffered']
    #allocation14 [shape = 'u8[32768]{0}', space=vmem, size = 0x8000, scoped, tag = 'input window, operand 9, single buffered']
    #allocation15 [shape = 's32[1]{0}', space=sflag, size = 0x4, scoped, tag = 'scoped memory for tpu_custom_call.1']
    #allocation16 [shape = 'u8[4096]{0}', space=vmem, size = 0x1000, scoped, tag = 'output window, operand 0, single buffered']
    %16 = vsyncpa [#allocation3], 0
    %17 = vsyncpa [#allocation6], 0
    %18 = vsyncpa [#allocation9], 0
    %19 = vsyncpa [#allocation12], 0
    %20 = vsyncpa [#allocation15], 0
    %21 = vsyncpa [#allocation4], 0
    // Predicated region
    $region2: #{tpu_custom_call.1} parent=1 // pred_check
      _
    $region3: #{tpu_custom_call.1} parent=1 // pred_check_branch
      %23 = sbr.rel (0) target = $region5
    $region4: #{tpu_custom_call.1} parent=1 // pred_region
      %25 = vsyncadd [#allocation3], 0
      %s27 = sshll.u32 %s0, 4
      %s28 = int_to_ptr.hbm [resolvable:$true] %s27
      %s29 = sshll.u32 [#allocation2], 4
      %s30 = int_to_ptr.vmem [resolvable:$true] %s29
      %32 = dma.hbm_to_vmem [thread:$0]  %s28, 128, %s30, [#allocation3]
    $region5: #{tpu_custom_call.1} parent=1 // pred_fallthru
      _
    // Predicated region
    $region6: #{tpu_custom_call.1} parent=1 // pred_check
      _
    $region7: #{tpu_custom_call.1} parent=1 // pred_check_branch
      %34 = sbr.rel (0) target = $region9
    $region8: #{tpu_custom_call.1} parent=1 // pred_region
      %36 = vsyncadd [#allocation6], 0
      %s37 = sshll.u32 %s1, 4
      %s38 = int_to_ptr.hbm [resolvable:$true] %s37
      %s39 = sshll.u32 [#allocation5], 4
      %s40 = int_to_ptr.vmem [resolvable:$true] %s39
      %45 = dma.hbm_to_vmem [thread:$0]  %s38, 2048, %s40, [#allocation6], 128, 128, 8
    $region9: #{tpu_custom_call.1} parent=1 // pred_fallthru
      _
    // Predicated region
    $region10: #{tpu_custom_call.1} parent=1 // pred_check
      _
    $region11: #{tpu_custom_call.1} parent=1 // pred_check_branch
      %47 = sbr.rel (0) target = $region13
    $region12: #{tpu_custom_call.1} parent=1 // pred_region
      %49 = vsyncadd [#allocation6], 0
      %s51 = sshll.u32 %s2, 4
      %s52 = int_to_ptr.hbm [resolvable:$true] %s51
      %s53 = sshll.u32 [#allocation7], 4
      %s54 = int_to_ptr.vmem [resolvable:$true] %s53
      %56 = dma.hbm_to_vmem [thread:$0]  %s52, 32, %s54, [#allocation6]
    $region13: #{tpu_custom_call.1} parent=1 // pred_fallthru
      _
    // Predicated region
    $region14: #{tpu_custom_call.1} parent=1 // pred_check
      _
    $region15: #{tpu_custom_call.1} parent=1 // pred_check_branch
      %58 = sbr.rel (0) target = $region17
    $region16: #{tpu_custom_call.1} parent=1 // pred_region
      %60 = vsyncadd [#allocation9], 0
      %s61 = sshll.u32 %s3, 4
      %s62 = int_to_ptr.hbm [resolvable:$true] %s61
      %s63 = sshll.u32 [#allocation8], 4
      %s64 = int_to_ptr.vmem [resolvable:$true] %s63
      %69 = dma.hbm_to_vmem [thread:$0]  %s62, 8192, %s64, [#allocation9], 256, 256, 16
    $region17: #{tpu_custom_call.1} parent=1 // pred_fallthru
      _
    // Predicated region
    $region18: #{tpu_custom_call.1} parent=1 // pred_check
      _
    $region19: #{tpu_custom_call.1} parent=1 // pred_check_branch
      %71 = sbr.rel (0) target = $region21
    $region20: #{tpu_custom_call.1} parent=1 // pred_region
      %73 = vsyncadd [#allocation9], 0
      %s75 = sshll.u32 %s4, 4
      %s76 = int_to_ptr.hbm [resolvable:$true] %s75
      %s77 = sshll.u32 [#allocation10], 4
      %s78 = int_to_ptr.vmem [resolvable:$true] %s77
      %80 = dma.hbm_to_vmem [thread:$0]  %s76, 64, %s78, [#allocation9]
    $region21: #{tpu_custom_call.1} parent=1 // pred_fallthru
      _
    // Predicated region
    $region22: #{tpu_custom_call.1} parent=1 // pred_check
      _
    $region23: #{tpu_custom_call.1} parent=1 // pred_check_branch
      %82 = sbr.rel (0) target = $region25
    $region24: #{tpu_custom_call.1} parent=1 // pred_region
      %84 = vsyncadd [#allocation12], 0
      %s85 = sshll.u32 %s5, 4
      %s86 = int_to_ptr.hbm [resolvable:$true] %s85
      %s87 = sshll.u32 [#allocation11], 4
      %s88 = int_to_ptr.vmem [resolvable:$true] %s87
      %93 = dma.hbm_to_vmem [thread:$0]  %s86, 8192, %s88, [#allocation12], 128, 128, 8
    $region25: #{tpu_custom_call.1} parent=1 // pred_fallthru
      _
    // Predicated region
    $region26: #{tpu_custom_call.1} parent=1 // pred_check
      _
    $region27: #{tpu_custom_call.1} parent=1 // pred_check_branch
      %95 = sbr.rel (0) target = $region29
    $region28: #{tpu_custom_call.1} parent=1 // pred_region
      _
    $region29: #{tpu_custom_call.1} parent=1 // pred_fallthru
      _
    // Predicated region
    $region30: #{tpu_custom_call.1} parent=1 // pred_check
      _
    $region31: #{tpu_custom_call.1} parent=1 // pred_check_branch
      %97 = sbr.rel (0) target = $region33
    $region32: #{tpu_custom_call.1} parent=1 // pred_region
      %99 = vsyncadd [#allocation12], 0
      %s100 = sshll.u32 %s7, 4
      %s101 = int_to_ptr.hbm [resolvable:$true] %s100
      %s102 = sshll.u32 [#allocation13], 4
      %s103 = int_to_ptr.vmem [resolvable:$true] %s102
      %108 = dma.hbm_to_vmem [thread:$0]  %s101, 2048, %s103, [#allocation12], 64, 64, 4
    $region33: #{tpu_custom_call.1} parent=1 // pred_fallthru
      _
    // Predicated region
    $region34: #{tpu_custom_call.1} parent=1 // pred_check
      _
    $region35: #{tpu_custom_call.1} parent=1 // pred_check_branch
      %110 = sbr.rel (0) target = $region37
    $region36: #{tpu_custom_call.1} parent=1 // pred_region
      _
    $region37: #{tpu_custom_call.1} parent=1 // pred_fallthru
      _
    // Predicated region
    $region38: #{tpu_custom_call.1} parent=1 // pred_check
      _
    $region39: #{tpu_custom_call.1} parent=1 // pred_check_branch
      %112 = sbr.rel (0) target = $region41
    $region40: #{tpu_custom_call.1} parent=1 // pred_region
      %114 = vsyncadd [#allocation15], 0
      %s115 = sshll.u32 %s9, 4
      %s116 = int_to_ptr.hbm [resolvable:$true] %s115
      %s117 = sshll.u32 [#allocation14], 4
      %s118 = int_to_ptr.vmem [resolvable:$true] %s117
      %123 = dma.hbm_to_vmem [thread:$0]  %s116, 1024, %s118, [#allocation15], 64, 64, 4
    $region41: #{tpu_custom_call.1} parent=1 // pred_fallthru
      _
    // Predicated region
    $region42: #{tpu_custom_call.1} parent=1 // pred_check
      _
    $region43: #{tpu_custom_call.1} parent=1 // pred_check_branch
      %125 = sbr.rel (0) target = $region45
    $region44: #{tpu_custom_call.1} parent=1 // pred_region
      _
    $region45: #{tpu_custom_call.1} parent=1 // pred_fallthru
      _
    // Predicated region
    $region46: #{tpu_custom_call.1} parent=1 // pred_check
      _
    $region47: #{tpu_custom_call.1} parent=1 // pred_check_branch
      %127 = sbr.rel (0) target = $region49
    $region48: #{tpu_custom_call.1} parent=1 // pred_region
      %129 = dma.done [#allocation3], 128
    $region49: #{tpu_custom_call.1} parent=1 // pred_fallthru
      _
    // Predicated region
    $region50: #{tpu_custom_call.1} parent=1 // pred_check
      _
    $region51: #{tpu_custom_call.1} parent=1 // pred_check_branch
      %131 = sbr.rel (0) target = $region53
    $region52: #{tpu_custom_call.1} parent=1 // pred_region
      %133 = dma.done [#allocation6], 2048
    $region53: #{tpu_custom_call.1} parent=1 // pred_fallthru
      _
    // Predicated region
    $region54: #{tpu_custom_call.1} parent=1 // pred_check
      _
    $region55: #{tpu_custom_call.1} parent=1 // pred_check_branch
      %135 = sbr.rel (0) target = $region57
    $region56: #{tpu_custom_call.1} parent=1 // pred_region
      %137 = dma.done [#allocation6], 32
    $region57: #{tpu_custom_call.1} parent=1 // pred_fallthru
      _
    // Predicated region
    $region58: #{tpu_custom_call.1} parent=1 // pred_check
      _
    $region59: #{tpu_custom_call.1} parent=1 // pred_check_branch
      %139 = sbr.rel (0) target = $region61
    $region60: #{tpu_custom_call.1} parent=1 // pred_region
      %141 = dma.done [#allocation9], 8192
    $region61: #{tpu_custom_call.1} parent=1 // pred_fallthru
      _
    // Predicated region
    $region62: #{tpu_custom_call.1} parent=1 // pred_check
      _
    $region63: #{tpu_custom_call.1} parent=1 // pred_check_branch
      %143 = sbr.rel (0) target = $region65
    $region64: #{tpu_custom_call.1} parent=1 // pred_region
      %145 = dma.done [#allocation9], 64
    $region65: #{tpu_custom_call.1} parent=1 // pred_fallthru
      _
    // Predicated region
    $region66: #{tpu_custom_call.1} parent=1 // pred_check
      _
    $region67: #{tpu_custom_call.1} parent=1 // pred_check_branch
      %147 = sbr.rel (0) target = $region69
    $region68: #{tpu_custom_call.1} parent=1 // pred_region
      %149 = dma.done [#allocation12], 8192
    $region69: #{tpu_custom_call.1} parent=1 // pred_fallthru
      _
    // Predicated region
    $region70: #{tpu_custom_call.1} parent=1 // pred_check
      _
    $region71: #{tpu_custom_call.1} parent=1 // pred_check_branch
      %151 = sbr.rel (0) target = $region73
    $region72: #{tpu_custom_call.1} parent=1 // pred_region
      %153 = dma.done [#allocation12], 2048
    $region73: #{tpu_custom_call.1} parent=1 // pred_fallthru
      _
    // Predicated region
    $region74: #{tpu_custom_call.1} parent=1 // pred_check
      _
    $region75: #{tpu_custom_call.1} parent=1 // pred_check_branch
      %155 = sbr.rel (0) target = $region77
    $region76: #{tpu_custom_call.1} parent=1 // pred_region
      %157 = dma.done [#allocation15], 1024
    $region77: #{tpu_custom_call.1} parent=1 // pred_fallthru
      _
    %v158 = vld [vmem:[#allocation2] sm:$0xff]
    %v159 = vpack.c.bf16 %v158, %v158
    %v160 = vld [vmem:[#allocation5] sm:$0xff]
    %v161 = vld [vmem:[#allocation5 + $0x8] sm:$0xff]
    %v162 = vld [vmem:[#allocation5 + $0x10] sm:$0xff]
    %v163 = vld [vmem:[#allocation5 + $0x18] sm:$0xff]
    %v164 = vld [vmem:[#allocation5 + $0x20] sm:$0xff]
    %v165 = vld [vmem:[#allocation5 + $0x28] sm:$0xff]
    %v166 = vld [vmem:[#allocation5 + $0x30] sm:$0xff]
    %v167 = vld [vmem:[#allocation5 + $0x38] sm:$0xff]
    %v168 = vld [vmem:[#allocation5 + $0x40] sm:$0xff]
    %v169 = vld [vmem:[#allocation5 + $0x48] sm:$0xff]
    %v170 = vld [vmem:[#allocation5 + $0x50] sm:$0xff]
    %v171 = vld [vmem:[#allocation5 + $0x58] sm:$0xff]
    %v172 = vld [vmem:[#allocation5 + $0x60] sm:$0xff]
    %v173 = vld [vmem:[#allocation5 + $0x68] sm:$0xff]
    %v174 = vld [vmem:[#allocation5 + $0x70] sm:$0xff]
    %v175 = vld [vmem:[#allocation5 + $0x78] sm:$0xff]
    %v176 = vld [vmem:[#allocation7] sm:$0x3]
    %v178 = vperm.slane %v176, 0
    %v179 = vperm.slane %v176, 1
    %v198 = vunpack.c.l.b16 %v160
    %v199 = vunpack.c.h.b16 %v160
    %v200 = vunpack.c.l.b16 %v161
    %v201 = vunpack.c.h.b16 %v161
    %v202 = vunpack.c.l.b16 %v162
    %v203 = vunpack.c.h.b16 %v162
    %v204 = vunpack.c.l.b16 %v163
    %v205 = vunpack.c.h.b16 %v163
    %v206 = vunpack.c.l.b16 %v164
    %v207 = vunpack.c.h.b16 %v164
    %v208 = vunpack.c.l.b16 %v165
    %v209 = vunpack.c.h.b16 %v165
    %v210 = vunpack.c.l.b16 %v166
    %v211 = vunpack.c.h.b16 %v166
    %v212 = vunpack.c.l.b16 %v167
    %v213 = vunpack.c.h.b16 %v167
    %v214 = vunpack.c.l.b16 %v168
    %v215 = vunpack.c.h.b16 %v168
    %v216 = vunpack.c.l.b16 %v169
    %v217 = vunpack.c.h.b16 %v169
    %v218 = vunpack.c.l.b16 %v170
    %v219 = vunpack.c.h.b16 %v170
    %v220 = vunpack.c.l.b16 %v171
    %v221 = vunpack.c.h.b16 %v171
    %v222 = vunpack.c.l.b16 %v172
    %v223 = vunpack.c.h.b16 %v172
    %v224 = vunpack.c.l.b16 %v173
    %v225 = vunpack.c.h.b16 %v173
    %v226 = vunpack.c.l.b16 %v174
    %v227 = vunpack.c.h.b16 %v174
    %v228 = vunpack.c.l.b16 %v175
    %v229 = vunpack.c.h.b16 %v175
    %v230 = vpack.c.b16 %v200, %v198
    %v231 = vpack.c.b16 %v201, %v199
    %v232 = vpack.c.b16 %v204, %v202
    %v233 = vpack.c.b16 %v205, %v203
    %v234 = vpack.c.b16 %v208, %v206
    %v235 = vpack.c.b16 %v209, %v207
    %v236 = vpack.c.b16 %v212, %v210
    %v237 = vpack.c.b16 %v213, %v211
    %v238 = vpack.c.b16 %v216, %v214
    %v239 = vpack.c.b16 %v217, %v215
    %v240 = vpack.c.b16 %v220, %v218
    %v241 = vpack.c.b16 %v221, %v219
    %v242 = vpack.c.b16 %v224, %v222
    %v243 = vpack.c.b16 %v225, %v223
    %v244 = vpack.c.b16 %v228, %v226
    %v245 = vpack.c.b16 %v229, %v227
    %262 = vmatpush.bf16.msra.mxu0 %v244
    %263 = vmatpush.bf16.msra.mxu0 %v242
    %264 = vmatpush.bf16.msra.mxu0 %v240
    %265 = vmatpush.bf16.msra.mxu0 %v238
    %266 = vmatpush.bf16.msra.mxu0 %v236
    %267 = vmatpush.bf16.msra.mxu0 %v234
    %268 = vmatpush.bf16.msra.mxu0 %v232
    %269 = vmatpush.bf16.msra.mxu0 %v230
    %270 = vmatmul.bf16.gmra.mxu0 %v159
    %v271 = vpop.f32.mrf.mxu0
    %v272 = vadd.f32 %v178, %v271
    %v273 = vpop.f32.mrf.mxu0
    %274 = vdwg.mxu0
    %275 = vmatpush.bf16.msra.mxu0 %v245
    %276 = vmatpush.bf16.msra.mxu0 %v243
    %277 = vmatpush.bf16.msra.mxu0 %v241
    %278 = vmatpush.bf16.msra.mxu0 %v239
    %279 = vmatpush.bf16.msra.mxu0 %v237
    %280 = vmatpush.bf16.msra.mxu0 %v235
    %281 = vmatpush.bf16.msra.mxu0 %v233
    %282 = vmatpush.bf16.msra.mxu0 %v231
    %283 = vmatmul.bf16.gmra.mxu0 %v159
    %v284 = vpop.f32.mrf.mxu0
    %v285 = vadd.f32 %v179, %v284
    %v286 = vpop.f32.mrf.mxu0
    %287 = vdwg.mxu0
    %v288 = vmax.f32 %v272, 0.0
    %v289 = vmax.f32 %v285, 0.0
    %v290 = vpack.c.bf16 %v288, %v288
    %v291 = vpack.c.bf16 %v289, %v289
    %v292 = vld [vmem:[#allocation8] sm:$0xff]
    %v293 = vld [vmem:[#allocation8 + $0x8] sm:$0xff]
    %v294 = vld [vmem:[#allocation8 + $0x10] sm:$0xff]
    %v295 = vld [vmem:[#allocation8 + $0x18] sm:$0xff]
    %v296 = vld [vmem:[#allocation8 + $0x20] sm:$0xff]
    %v297 = vld [vmem:[#allocation8 + $0x28] sm:$0xff]
    %v298 = vld [vmem:[#allocation8 + $0x30] sm:$0xff]
    %v299 = vld [vmem:[#allocation8 + $0x38] sm:$0xff]
    %v300 = vld [vmem:[#allocation8 + $0x40] sm:$0xff]
    %v301 = vld [vmem:[#allocation8 + $0x48] sm:$0xff]
    %v302 = vld [vmem:[#allocation8 + $0x50] sm:$0xff]
    %v303 = vld [vmem:[#allocation8 + $0x58] sm:$0xff]
    %v304 = vld [vmem:[#allocation8 + $0x60] sm:$0xff]
    %v305 = vld [vmem:[#allocation8 + $0x68] sm:$0xff]
    %v306 = vld [vmem:[#allocation8 + $0x70] sm:$0xff]
    %v307 = vld [vmem:[#allocation8 + $0x78] sm:$0xff]
    %v308 = vld [vmem:[#allocation8 + $0x80] sm:$0xff]
    %v309 = vld [vmem:[#allocation8 + $0x88] sm:$0xff]
    %v310 = vld [vmem:[#allocation8 + $0x90] sm:$0xff]
    %v311 = vld [vmem:[#allocation8 + $0x98] sm:$0xff]
    %v312 = vld [vmem:[#allocation8 + $0xa0] sm:$0xff]
    %v313 = vld [vmem:[#allocation8 + $0xa8] sm:$0xff]
    %v314 = vld [vmem:[#allocation8 + $0xb0] sm:$0xff]
    %v315 = vld [vmem:[#allocation8 + $0xb8] sm:$0xff]
    %v316 = vld [vmem:[#allocation8 + $0xc0] sm:$0xff]
    %v317 = vld [vmem:[#allocation8 + $0xc8] sm:$0xff]
    %v318 = vld [vmem:[#allocation8 + $0xd0] sm:$0xff]
    %v319 = vld [vmem:[#allocation8 + $0xd8] sm:$0xff]
    %v320 = vld [vmem:[#allocation8 + $0xe0] sm:$0xff]
    %v321 = vld [vmem:[#allocation8 + $0xe8] sm:$0xff]
    %v322 = vld [vmem:[#allocation8 + $0xf0] sm:$0xff]
    %v323 = vld [vmem:[#allocation8 + $0xf8] sm:$0xff]
    %v324 = vld [vmem:[#allocation8 + $0x100] sm:$0xff]
    %v325 = vld [vmem:[#allocation8 + $0x108] sm:$0xff]
    %v326 = vld [vmem:[#allocation8 + $0x110] sm:$0xff]
    %v327 = vld [vmem:[#allocation8 + $0x118] sm:$0xff]
    %v328 = vld [vmem:[#allocation8 + $0x120] sm:$0xff]
    %v329 = vld [vmem:[#allocation8 + $0x128] sm:$0xff]
    %v330 = vld [vmem:[#allocation8 + $0x130] sm:$0xff]
    %v331 = vld [vmem:[#allocation8 + $0x138] sm:$0xff]
    %v332 = vld [vmem:[#allocation8 + $0x140] sm:$0xff]
    %v333 = vld [vmem:[#allocation8 + $0x148] sm:$0xff]
    %v334 = vld [vmem:[#allocation8 + $0x150] sm:$0xff]
    %v335 = vld [vmem:[#allocation8 + $0x158] sm:$0xff]
    %v336 = vld [vmem:[#allocation8 + $0x160] sm:$0xff]
    %v337 = vld [vmem:[#allocation8 + $0x168] sm:$0xff]
    %v338 = vld [vmem:[#allocation8 + $0x170] sm:$0xff]
    %v339 = vld [vmem:[#allocation8 + $0x178] sm:$0xff]
    %v340 = vld [vmem:[#allocation8 + $0x180] sm:$0xff]
    %v341 = vld [vmem:[#allocation8 + $0x188] sm:$0xff]
    %v342 = vld [vmem:[#allocation8 + $0x190] sm:$0xff]
    %v343 = vld [vmem:[#allocation8 + $0x198] sm:$0xff]
    %v344 = vld [vmem:[#allocation8 + $0x1a0] sm:$0xff]
    %v345 = vld [vmem:[#allocation8 + $0x1a8] sm:$0xff]
    %v346 = vld [vmem:[#allocation8 + $0x1b0] sm:$0xff]
    %v347 = vld [vmem:[#allocation8 + $0x1b8] sm:$0xff]
    %v348 = vld [vmem:[#allocation8 + $0x1c0] sm:$0xff]
    %v349 = vld [vmem:[#allocation8 + $0x1c8] sm:$0xff]
    %v350 = vld [vmem:[#allocation8 + $0x1d0] sm:$0xff]
    %v351 = vld [vmem:[#allocation8 + $0x1d8] sm:$0xff]
    %v352 = vld [vmem:[#allocation8 + $0x1e0] sm:$0xff]
    %v353 = vld [vmem:[#allocation8 + $0x1e8] sm:$0xff]
    %v354 = vld [vmem:[#allocation8 + $0x1f0] sm:$0xff]
    %v355 = vld [vmem:[#allocation8 + $0x1f8] sm:$0xff]
    %v356 = vld [vmem:[#allocation10] sm:$0xf]
    %v358 = vperm.slane %v356, 0
    %v359 = vperm.slane %v356, 1
    %v360 = vperm.slane %v356, 2
    %v361 = vperm.slane %v356, 3
    %v430 = vunpack.c.l.b16 %v292
    %v431 = vunpack.c.h.b16 %v292
    %v432 = vunpack.c.l.b16 %v293
    %v433 = vunpack.c.h.b16 %v293
    %v434 = vunpack.c.l.b16 %v294
    %v435 = vunpack.c.h.b16 %v294
    %v436 = vunpack.c.l.b16 %v295
    %v437 = vunpack.c.h.b16 %v295
    %v438 = vunpack.c.l.b16 %v296
    %v439 = vunpack.c.h.b16 %v296
    %v440 = vunpack.c.l.b16 %v297
    %v441 = vunpack.c.h.b16 %v297
    %v442 = vunpack.c.l.b16 %v298
    %v443 = vunpack.c.h.b16 %v298
    %v444 = vunpack.c.l.b16 %v299
    %v445 = vunpack.c.h.b16 %v299
    %v446 = vunpack.c.l.b16 %v300
    %v447 = vunpack.c.h.b16 %v300
    %v448 = vunpack.c.l.b16 %v301
    %v449 = vunpack.c.h.b16 %v301
    %v450 = vunpack.c.l.b16 %v302
    %v451 = vunpack.c.h.b16 %v302
    %v452 = vunpack.c.l.b16 %v303
    %v453 = vunpack.c.h.b16 %v303
    %v454 = vunpack.c.l.b16 %v304
    %v455 = vunpack.c.h.b16 %v304
    %v456 = vunpack.c.l.b16 %v305
    %v457 = vunpack.c.h.b16 %v305
    %v458 = vunpack.c.l.b16 %v306
    %v459 = vunpack.c.h.b16 %v306
    %v460 = vunpack.c.l.b16 %v307
    %v461 = vunpack.c.h.b16 %v307
    %v462 = vunpack.c.l.b16 %v308
    %v463 = vunpack.c.h.b16 %v308
    %v464 = vunpack.c.l.b16 %v309
    %v465 = vunpack.c.h.b16 %v309
    %v466 = vunpack.c.l.b16 %v310
    %v467 = vunpack.c.h.b16 %v310
    %v468 = vunpack.c.l.b16 %v311
    %v469 = vunpack.c.h.b16 %v311
    %v470 = vunpack.c.l.b16 %v312
    %v471 = vunpack.c.h.b16 %v312
    %v472 = vunpack.c.l.b16 %v313
    %v473 = vunpack.c.h.b16 %v313
    %v474 = vunpack.c.l.b16 %v314
    %v475 = vunpack.c.h.b16 %v314
    %v476 = vunpack.c.l.b16 %v315
    %v477 = vunpack.c.h.b16 %v315
    %v478 = vunpack.c.l.b16 %v316
    %v479 = vunpack.c.h.b16 %v316
    %v480 = vunpack.c.l.b16 %v317
    %v481 = vunpack.c.h.b16 %v317
    %v482 = vunpack.c.l.b16 %v318
    %v483 = vunpack.c.h.b16 %v318
    %v484 = vunpack.c.l.b16 %v319
    %v485 = vunpack.c.h.b16 %v319
    %v486 = vunpack.c.l.b16 %v320
    %v487 = vunpack.c.h.b16 %v320
    %v488 = vunpack.c.l.b16 %v321
    %v489 = vunpack.c.h.b16 %v321
    %v490 = vunpack.c.l.b16 %v322
    %v491 = vunpack.c.h.b16 %v322
    %v492 = vunpack.c.l.b16 %v323
    %v493 = vunpack.c.h.b16 %v323
    %v494 = vunpack.c.l.b16 %v324
    %v495 = vunpack.c.h.b16 %v324
    %v496 = vunpack.c.l.b16 %v325
    %v497 = vunpack.c.h.b16 %v325
    %v498 = vunpack.c.l.b16 %v326
    %v499 = vunpack.c.h.b16 %v326
    %v500 = vunpack.c.l.b16 %v327
    %v501 = vunpack.c.h.b16 %v327
    %v502 = vunpack.c.l.b16 %v328
    %v503 = vunpack.c.h.b16 %v328
    %v504 = vunpack.c.l.b16 %v329
    %v505 = vunpack.c.h.b16 %v329
    %v506 = vunpack.c.l.b16 %v330
    %v507 = vunpack.c.h.b16 %v330
    %v508 = vunpack.c.l.b16 %v331
    %v509 = vunpack.c.h.b16 %v331
    %v510 = vunpack.c.l.b16 %v332
    %v511 = vunpack.c.h.b16 %v332
    %v512 = vunpack.c.l.b16 %v333
    %v513 = vunpack.c.h.b16 %v333
    %v514 = vunpack.c.l.b16 %v334
    %v515 = vunpack.c.h.b16 %v334
    %v516 = vunpack.c.l.b16 %v335
    %v517 = vunpack.c.h.b16 %v335
    %v518 = vunpack.c.l.b16 %v336
    %v519 = vunpack.c.h.b16 %v336
    %v520 = vunpack.c.l.b16 %v337
    %v521 = vunpack.c.h.b16 %v337
    %v522 = vunpack.c.l.b16 %v338
    %v523 = vunpack.c.h.b16 %v338
    %v524 = vunpack.c.l.b16 %v339
    %v525 = vunpack.c.h.b16 %v339
    %v526 = vunpack.c.l.b16 %v340
    %v527 = vunpack.c.h.b16 %v340
    %v528 = vunpack.c.l.b16 %v341
    %v529 = vunpack.c.h.b16 %v341
    %v530 = vunpack.c.l.b16 %v342
    %v531 = vunpack.c.h.b16 %v342
    %v532 = vunpack.c.l.b16 %v343
    %v533 = vunpack.c.h.b16 %v343
    %v534 = vunpack.c.l.b16 %v344
    %v535 = vunpack.c.h.b16 %v344
    %v536 = vunpack.c.l.b16 %v345
    %v537 = vunpack.c.h.b16 %v345
    %v538 = vunpack.c.l.b16 %v346
    %v539 = vunpack.c.h.b16 %v346
    %v540 = vunpack.c.l.b16 %v347
    %v541 = vunpack.c.h.b16 %v347
    %v542 = vunpack.c.l.b16 %v348
    %v543 = vunpack.c.h.b16 %v348
    %v544 = vunpack.c.l.b16 %v349
    %v545 = vunpack.c.h.b16 %v349
    %v546 = vunpack.c.l.b16 %v350
    %v547 = vunpack.c.h.b16 %v350
    %v548 = vunpack.c.l.b16 %v351
    %v549 = vunpack.c.h.b16 %v351
    %v550 = vunpack.c.l.b16 %v352
    %v551 = vunpack.c.h.b16 %v352
    %v552 = vunpack.c.l.b16 %v353
    %v553 = vunpack.c.h.b16 %v353
    %v554 = vunpack.c.l.b16 %v354
    %v555 = vunpack.c.h.b16 %v354
    %v556 = vunpack.c.l.b16 %v355
    %v557 = vunpack.c.h.b16 %v355
    %v558 = vpack.c.b16 %v434, %v430
    %v559 = vpack.c.b16 %v435, %v431
    %v560 = vpack.c.b16 %v436, %v432
    %v561 = vpack.c.b16 %v437, %v433
    %v562 = vpack.c.b16 %v442, %v438
    %v563 = vpack.c.b16 %v443, %v439
    %v564 = vpack.c.b16 %v444, %v440
    %v565 = vpack.c.b16 %v445, %v441
    %v566 = vpack.c.b16 %v450, %v446
    %v567 = vpack.c.b16 %v451, %v447
    %v568 = vpack.c.b16 %v452, %v448
    %v569 = vpack.c.b16 %v453, %v449
    %v570 = vpack.c.b16 %v458, %v454
    %v571 = vpack.c.b16 %v459, %v455
    %v572 = vpack.c.b16 %v460, %v456
    %v573 = vpack.c.b16 %v461, %v457
    %v574 = vpack.c.b16 %v466, %v462
    %v575 = vpack.c.b16 %v467, %v463
    %v576 = vpack.c.b16 %v468, %v464
    %v577 = vpack.c.b16 %v469, %v465
    %v578 = vpack.c.b16 %v474, %v470
    %v579 = vpack.c.b16 %v475, %v471
    %v580 = vpack.c.b16 %v476, %v472
    %v581 = vpack.c.b16 %v477, %v473
    %v582 = vpack.c.b16 %v482, %v478
    %v583 = vpack.c.b16 %v483, %v479
    %v584 = vpack.c.b16 %v484, %v480
    %v585 = vpack.c.b16 %v485, %v481
    %v586 = vpack.c.b16 %v490, %v486
    %v587 = vpack.c.b16 %v491, %v487
    %v588 = vpack.c.b16 %v492, %v488
    %v589 = vpack.c.b16 %v493, %v489
    %v590 = vpack.c.b16 %v498, %v494
    %v591 = vpack.c.b16 %v499, %v495
    %v592 = vpack.c.b16 %v500, %v496
    %v593 = vpack.c.b16 %v501, %v497
    %v594 = vpack.c.b16 %v506, %v502
    %v595 = vpack.c.b16 %v507, %v503
    %v596 = vpack.c.b16 %v508, %v504
    %v597 = vpack.c.b16 %v509, %v505
    %v598 = vpack.c.b16 %v514, %v510
    %v599 = vpack.c.b16 %v515, %v511
    %v600 = vpack.c.b16 %v516, %v512
    %v601 = vpack.c.b16 %v517, %v513
    %v602 = vpack.c.b16 %v522, %v518
    %v603 = vpack.c.b16 %v523, %v519
    %v604 = vpack.c.b16 %v524, %v520
    %v605 = vpack.c.b16 %v525, %v521
    %v606 = vpack.c.b16 %v530, %v526
    %v607 = vpack.c.b16 %v531, %v527
    %v608 = vpack.c.b16 %v532, %v528
    %v609 = vpack.c.b16 %v533, %v529
    %v610 = vpack.c.b16 %v538, %v534
    %v611 = vpack.c.b16 %v539, %v535
    %v612 = vpack.c.b16 %v540, %v536
    %v613 = vpack.c.b16 %v541, %v537
    %v614 = vpack.c.b16 %v546, %v542
    %v615 = vpack.c.b16 %v547, %v543
    %v616 = vpack.c.b16 %v548, %v544
    %v617 = vpack.c.b16 %v549, %v545
    %v618 = vpack.c.b16 %v554, %v550
    %v619 = vpack.c.b16 %v555, %v551
    %v620 = vpack.c.b16 %v556, %v552
    %v621 = vpack.c.b16 %v557, %v553
    %686 = vmatpush.bf16.msra.mxu0 %v586
    %687 = vmatpush.bf16.msra.mxu0 %v582
    %688 = vmatpush.bf16.msra.mxu0 %v578
    %689 = vmatpush.bf16.msra.mxu0 %v574
    %690 = vmatpush.bf16.msra.mxu0 %v570
    %691 = vmatpush.bf16.msra.mxu0 %v566
    %692 = vmatpush.bf16.msra.mxu0 %v562
    %693 = vmatpush.bf16.msra.mxu0 %v558
    %694 = vmatmul.bf16.gmra.mxu0 %v290
    %v695 = vpop.f32.mrf.mxu0
    %v696 = vadd.f32 %v358, %v695
    %v697 = vpop.f32.mrf.mxu0
    %698 = vdwg.mxu0
    %699 = vmatpush.bf16.msra.mxu0 %v618
    %700 = vmatpush.bf16.msra.mxu0 %v614
    %701 = vmatpush.bf16.msra.mxu0 %v610
    %702 = vmatpush.bf16.msra.mxu0 %v606
    %703 = vmatpush.bf16.msra.mxu0 %v602
    %704 = vmatpush.bf16.msra.mxu0 %v598
    %705 = vmatpush.bf16.msra.mxu0 %v594
    %706 = vmatpush.bf16.msra.mxu0 %v590
    %707 = vmatmul.bf16.gmra.mxu0 %v291
    %v708 = vpop.f32.mrf.mxu0
    %v709 = vadd.f32 %v696, %v708
    %v710 = vpop.f32.mrf.mxu0
    %711 = vdwg.mxu0
    %712 = vmatpush.bf16.msra.mxu0 %v587
    %713 = vmatpush.bf16.msra.mxu0 %v583
    %714 = vmatpush.bf16.msra.mxu0 %v579
    %715 = vmatpush.bf16.msra.mxu0 %v575
    %716 = vmatpush.bf16.msra.mxu0 %v571
    %717 = vmatpush.bf16.msra.mxu0 %v567
    %718 = vmatpush.bf16.msra.mxu0 %v563
    %719 = vmatpush.bf16.msra.mxu0 %v559
    %720 = vmatmul.bf16.gmra.mxu0 %v290
    %v721 = vpop.f32.mrf.mxu0
    %v722 = vadd.f32 %v359, %v721
    %v723 = vpop.f32.mrf.mxu0
    %724 = vdwg.mxu0
    %725 = vmatpush.bf16.msra.mxu0 %v619
    %726 = vmatpush.bf16.msra.mxu0 %v615
    %727 = vmatpush.bf16.msra.mxu0 %v611
    %728 = vmatpush.bf16.msra.mxu0 %v607
    %729 = vmatpush.bf16.msra.mxu0 %v603
    %730 = vmatpush.bf16.msra.mxu0 %v599
    %731 = vmatpush.bf16.msra.mxu0 %v595
    %732 = vmatpush.bf16.msra.mxu0 %v591
    %733 = vmatmul.bf16.gmra.mxu0 %v291
    %v734 = vpop.f32.mrf.mxu0
    %v735 = vadd.f32 %v722, %v734
    %v736 = vpop.f32.mrf.mxu0
    %737 = vdwg.mxu0
    %738 = vmatpush.bf16.msra.mxu0 %v588
    %739 = vmatpush.bf16.msra.mxu0 %v584
    %740 = vmatpush.bf16.msra.mxu0 %v580
    %741 = vmatpush.bf16.msra.mxu0 %v576
    %742 = vmatpush.bf16.msra.mxu0 %v572
    %743 = vmatpush.bf16.msra.mxu0 %v568
    %744 = vmatpush.bf16.msra.mxu0 %v564
    %745 = vmatpush.bf16.msra.mxu0 %v560
    %746 = vmatmul.bf16.gmra.mxu0 %v290
    %v747 = vpop.f32.mrf.mxu0
    %v748 = vadd.f32 %v360, %v747
    %v749 = vpop.f32.mrf.mxu0
    %750 = vdwg.mxu0
    %751 = vmatpush.bf16.msra.mxu0 %v620
    %752 = vmatpush.bf16.msra.mxu0 %v616
    %753 = vmatpush.bf16.msra.mxu0 %v612
    %754 = vmatpush.bf16.msra.mxu0 %v608
    %755 = vmatpush.bf16.msra.mxu0 %v604
    %756 = vmatpush.bf16.msra.mxu0 %v600
    %757 = vmatpush.bf16.msra.mxu0 %v596
    %758 = vmatpush.bf16.msra.mxu0 %v592
    %759 = vmatmul.bf16.gmra.mxu0 %v291
    %v760 = vpop.f32.mrf.mxu0
    %v761 = vadd.f32 %v748, %v760
    %v762 = vpop.f32.mrf.mxu0
    %763 = vdwg.mxu0
    %764 = vmatpush.bf16.msra.mxu0 %v589
    %765 = vmatpush.bf16.msra.mxu0 %v585
    %766 = vmatpush.bf16.msra.mxu0 %v581
    %767 = vmatpush.bf16.msra.mxu0 %v577
    %768 = vmatpush.bf16.msra.mxu0 %v573
    %769 = vmatpush.bf16.msra.mxu0 %v569
    %770 = vmatpush.bf16.msra.mxu0 %v565
    %771 = vmatpush.bf16.msra.mxu0 %v561
    %772 = vmatmul.bf16.gmra.mxu0 %v290
    %v773 = vpop.f32.mrf.mxu0
    %v774 = vadd.f32 %v361, %v773
    %v775 = vpop.f32.mrf.mxu0
    %776 = vdwg.mxu0
    %777 = vmatpush.bf16.msra.mxu0 %v621
    %778 = vmatpush.bf16.msra.mxu0 %v617
    %779 = vmatpush.bf16.msra.mxu0 %v613
    %780 = vmatpush.bf16.msra.mxu0 %v609
    %781 = vmatpush.bf16.msra.mxu0 %v605
    %782 = vmatpush.bf16.msra.mxu0 %v601
    %783 = vmatpush.bf16.msra.mxu0 %v597
    %784 = vmatpush.bf16.msra.mxu0 %v593
    %785 = vmatmul.bf16.gmra.mxu0 %v291
    %v786 = vpop.f32.mrf.mxu0
    %v787 = vadd.f32 %v774, %v786
    %v788 = vpop.f32.mrf.mxu0
    %789 = vdwg.mxu0
    %v790 = vmax.f32 %v709, 0.0
    %v791 = vmax.f32 %v735, 0.0
    %v792 = vmax.f32 %v761, 0.0
    %v793 = vmax.f32 %v787, 0.0
    %v794 = vpack.c.bf16 %v790, %v790
    %v795 = vpack.c.bf16 %v791, %v791
    %v796 = vpack.c.bf16 %v792, %v792
    %v797 = vpack.c.bf16 %v793, %v793
    %v798 = vld [vmem:[#allocation11] sm:$0xff]
    %v799 = vld [vmem:[#allocation11 + $0x8] sm:$0xff]
    %v800 = vld [vmem:[#allocation11 + $0x10] sm:$0xff]
    %v801 = vld [vmem:[#allocation11 + $0x18] sm:$0xff]
    %v802 = vld [vmem:[#allocation11 + $0x20] sm:$0xff]
    %v803 = vld [vmem:[#allocation11 + $0x28] sm:$0xff]
    %v804 = vld [vmem:[#allocation11 + $0x30] sm:$0xff]
    %v805 = vld [vmem:[#allocation11 + $0x38] sm:$0xff]
    %v806 = vld [vmem:[#allocation11 + $0x40] sm:$0xff]
    %v807 = vld [vmem:[#allocation11 + $0x48] sm:$0xff]
    %v808 = vld [vmem:[#allocation11 + $0x50] sm:$0xff]
    %v809 = vld [vmem:[#allocation11 + $0x58] sm:$0xff]
    %v810 = vld [vmem:[#allocation11 + $0x60] sm:$0xff]
    %v811 = vld [vmem:[#allocation11 + $0x68] sm:$0xff]
    %v812 = vld [vmem:[#allocation11 + $0x70] sm:$0xff]
    %v813 = vld [vmem:[#allocation11 + $0x78] sm:$0xff]
    %v814 = vld [vmem:[#allocation11 + $0x80] sm:$0xff]
    %v815 = vld [vmem:[#allocation11 + $0x88] sm:$0xff]
    %v816 = vld [vmem:[#allocation11 + $0x90] sm:$0xff]
    %v817 = vld [vmem:[#allocation11 + $0x98] sm:$0xff]
    %v818 = vld [vmem:[#allocation11 + $0xa0] sm:$0xff]
    %v819 = vld [vmem:[#allocation11 + $0xa8] sm:$0xff]
    %v820 = vld [vmem:[#allocation11 + $0xb0] sm:$0xff]
    %v821 = vld [vmem:[#allocation11 + $0xb8] sm:$0xff]
    %v822 = vld [vmem:[#allocation11 + $0xc0] sm:$0xff]
    %v823 = vld [vmem:[#allocation11 + $0xc8] sm:$0xff]
    %v824 = vld [vmem:[#allocation11 + $0xd0] sm:$0xff]
    %v825 = vld [vmem:[#allocation11 + $0xd8] sm:$0xff]
    %v826 = vld [vmem:[#allocation11 + $0xe0] sm:$0xff]
    %v827 = vld [vmem:[#allocation11 + $0xe8] sm:$0xff]
    %v828 = vld [vmem:[#allocation11 + $0xf0] sm:$0xff]
    %v829 = vld [vmem:[#allocation11 + $0xf8] sm:$0xff]
    %v830 = vld [vmem:[#allocation11 + $0x100] sm:$0xff]
    %v831 = vld [vmem:[#allocation11 + $0x108] sm:$0xff]
    %v832 = vld [vmem:[#allocation11 + $0x110] sm:$0xff]
    %v833 = vld [vmem:[#allocation11 + $0x118] sm:$0xff]
    %v834 = vld [vmem:[#allocation11 + $0x120] sm:$0xff]
    %v835 = vld [vmem:[#allocation11 + $0x128] sm:$0xff]
    %v836 = vld [vmem:[#allocation11 + $0x130] sm:$0xff]
    %v837 = vld [vmem:[#allocation11 + $0x138] sm:$0xff]
    %v838 = vld [vmem:[#allocation11 + $0x140] sm:$0xff]
    %v839 = vld [vmem:[#allocation11 + $0x148] sm:$0xff]
    %v840 = vld [vmem:[#allocation11 + $0x150] sm:$0xff]
    %v841 = vld [vmem:[#allocation11 + $0x158] sm:$0xff]
    %v842 = vld [vmem:[#allocation11 + $0x160] sm:$0xff]
    %v843 = vld [vmem:[#allocation11 + $0x168] sm:$0xff]
    %v844 = vld [vmem:[#allocation11 + $0x170] sm:$0xff]
    %v845 = vld [vmem:[#allocation11 + $0x178] sm:$0xff]
    %v846 = vld [vmem:[#allocation11 + $0x180] sm:$0xff]
    %v847 = vld [vmem:[#allocation11 + $0x188] sm:$0xff]
    %v848 = vld [vmem:[#allocation11 + $0x190] sm:$0xff]
    %v849 = vld [vmem:[#allocation11 + $0x198] sm:$0xff]
    %v850 = vld [vmem:[#allocation11 + $0x1a0] sm:$0xff]
    %v851 = vld [vmem:[#allocation11 + $0x1a8] sm:$0xff]
    %v852 = vld [vmem:[#allocation11 + $0x1b0] sm:$0xff]
    %v853 = vld [vmem:[#allocation11 + $0x1b8] sm:$0xff]
    %v854 = vld [vmem:[#allocation11 + $0x1c0] sm:$0xff]
    %v855 = vld [vmem:[#allocation11 + $0x1c8] sm:$0xff]
    %v856 = vld [vmem:[#allocation11 + $0x1d0] sm:$0xff]
    %v857 = vld [vmem:[#allocation11 + $0x1d8] sm:$0xff]
    %v858 = vld [vmem:[#allocation11 + $0x1e0] sm:$0xff]
    %v859 = vld [vmem:[#allocation11 + $0x1e8] sm:$0xff]
    %v860 = vld [vmem:[#allocation11 + $0x1f0] sm:$0xff]
    %v861 = vld [vmem:[#allocation11 + $0x1f8] sm:$0xff]
    %v862 = vld [vmem:[%s6] sm:$0x3]
    %v864 = vperm.slane %v862, 0
    %v865 = vperm.slane %v862, 1
    %v932 = vunpack.c.l.b16 %v798
    %v933 = vunpack.c.h.b16 %v798
    %v934 = vunpack.c.l.b16 %v799
    %v935 = vunpack.c.h.b16 %v799
    %v936 = vunpack.c.l.b16 %v800
    %v937 = vunpack.c.h.b16 %v800
    %v938 = vunpack.c.l.b16 %v801
    %v939 = vunpack.c.h.b16 %v801
    %v940 = vunpack.c.l.b16 %v802
    %v941 = vunpack.c.h.b16 %v802
    %v942 = vunpack.c.l.b16 %v803
    %v943 = vunpack.c.h.b16 %v803
    %v944 = vunpack.c.l.b16 %v804
    %v945 = vunpack.c.h.b16 %v804
    %v946 = vunpack.c.l.b16 %v805
    %v947 = vunpack.c.h.b16 %v805
    %v948 = vunpack.c.l.b16 %v806
    %v949 = vunpack.c.h.b16 %v806
    %v950 = vunpack.c.l.b16 %v807
    %v951 = vunpack.c.h.b16 %v807
    %v952 = vunpack.c.l.b16 %v808
    %v953 = vunpack.c.h.b16 %v808
    %v954 = vunpack.c.l.b16 %v809
    %v955 = vunpack.c.h.b16 %v809
    %v956 = vunpack.c.l.b16 %v810
    %v957 = vunpack.c.h.b16 %v810
    %v958 = vunpack.c.l.b16 %v811
    %v959 = vunpack.c.h.b16 %v811
    %v960 = vunpack.c.l.b16 %v812
    %v961 = vunpack.c.h.b16 %v812
    %v962 = vunpack.c.l.b16 %v813
    %v963 = vunpack.c.h.b16 %v813
    %v964 = vunpack.c.l.b16 %v814
    %v965 = vunpack.c.h.b16 %v814
    %v966 = vunpack.c.l.b16 %v815
    %v967 = vunpack.c.h.b16 %v815
    %v968 = vunpack.c.l.b16 %v816
    %v969 = vunpack.c.h.b16 %v816
    %v970 = vunpack.c.l.b16 %v817
    %v971 = vunpack.c.h.b16 %v817
    %v972 = vunpack.c.l.b16 %v818
    %v973 = vunpack.c.h.b16 %v818
    %v974 = vunpack.c.l.b16 %v819
    %v975 = vunpack.c.h.b16 %v819
    %v976 = vunpack.c.l.b16 %v820
    %v977 = vunpack.c.h.b16 %v820
    %v978 = vunpack.c.l.b16 %v821
    %v979 = vunpack.c.h.b16 %v821
    %v980 = vunpack.c.l.b16 %v822
    %v981 = vunpack.c.h.b16 %v822
    %v982 = vunpack.c.l.b16 %v823
    %v983 = vunpack.c.h.b16 %v823
    %v984 = vunpack.c.l.b16 %v824
    %v985 = vunpack.c.h.b16 %v824
    %v986 = vunpack.c.l.b16 %v825
    %v987 = vunpack.c.h.b16 %v825
    %v988 = vunpack.c.l.b16 %v826
    %v989 = vunpack.c.h.b16 %v826
    %v990 = vunpack.c.l.b16 %v827
    %v991 = vunpack.c.h.b16 %v827
    %v992 = vunpack.c.l.b16 %v828
    %v993 = vunpack.c.h.b16 %v828
    %v994 = vunpack.c.l.b16 %v829
    %v995 = vunpack.c.h.b16 %v829
    %v996 = vunpack.c.l.b16 %v830
    %v997 = vunpack.c.h.b16 %v830
    %v998 = vunpack.c.l.b16 %v831
    %v999 = vunpack.c.h.b16 %v831
    %v1000 = vunpack.c.l.b16 %v832
    %v1001 = vunpack.c.h.b16 %v832
    %v1002 = vunpack.c.l.b16 %v833
    %v1003 = vunpack.c.h.b16 %v833
    %v1004 = vunpack.c.l.b16 %v834
    %v1005 = vunpack.c.h.b16 %v834
    %v1006 = vunpack.c.l.b16 %v835
    %v1007 = vunpack.c.h.b16 %v835
    %v1008 = vunpack.c.l.b16 %v836
    %v1009 = vunpack.c.h.b16 %v836
    %v1010 = vunpack.c.l.b16 %v837
    %v1011 = vunpack.c.h.b16 %v837
    %v1012 = vunpack.c.l.b16 %v838
    %v1013 = vunpack.c.h.b16 %v838
    %v1014 = vunpack.c.l.b16 %v839
    %v1015 = vunpack.c.h.b16 %v839
    %v1016 = vunpack.c.l.b16 %v840
    %v1017 = vunpack.c.h.b16 %v840
    %v1018 = vunpack.c.l.b16 %v841
    %v1019 = vunpack.c.h.b16 %v841
    %v1020 = vunpack.c.l.b16 %v842
    %v1021 = vunpack.c.h.b16 %v842
    %v1022 = vunpack.c.l.b16 %v843
    %v1023 = vunpack.c.h.b16 %v843
    %v1024 = vunpack.c.l.b16 %v844
    %v1025 = vunpack.c.h.b16 %v844
    %v1026 = vunpack.c.l.b16 %v845
    %v1027 = vunpack.c.h.b16 %v845
    %v1028 = vunpack.c.l.b16 %v846
    %v1029 = vunpack.c.h.b16 %v846
    %v1030 = vunpack.c.l.b16 %v847
    %v1031 = vunpack.c.h.b16 %v847
    %v1032 = vunpack.c.l.b16 %v848
    %v1033 = vunpack.c.h.b16 %v848
    %v1034 = vunpack.c.l.b16 %v849
    %v1035 = vunpack.c.h.b16 %v849
    %v1036 = vunpack.c.l.b16 %v850
    %v1037 = vunpack.c.h.b16 %v850
    %v1038 = vunpack.c.l.b16 %v851
    %v1039 = vunpack.c.h.b16 %v851
    %v1040 = vunpack.c.l.b16 %v852
    %v1041 = vunpack.c.h.b16 %v852
    %v1042 = vunpack.c.l.b16 %v853
    %v1043 = vunpack.c.h.b16 %v853
    %v1044 = vunpack.c.l.b16 %v854
    %v1045 = vunpack.c.h.b16 %v854
    %v1046 = vunpack.c.l.b16 %v855
    %v1047 = vunpack.c.h.b16 %v855
    %v1048 = vunpack.c.l.b16 %v856
    %v1049 = vunpack.c.h.b16 %v856
    %v1050 = vunpack.c.l.b16 %v857
    %v1051 = vunpack.c.h.b16 %v857
    %v1052 = vunpack.c.l.b16 %v858
    %v1053 = vunpack.c.h.b16 %v858
    %v1054 = vunpack.c.l.b16 %v859
    %v1055 = vunpack.c.h.b16 %v859
    %v1056 = vunpack.c.l.b16 %v860
    %v1057 = vunpack.c.h.b16 %v860
    %v1058 = vunpack.c.l.b16 %v861
    %v1059 = vunpack.c.h.b16 %v861
    %v1060 = vpack.c.b16 %v934, %v932
    %v1061 = vpack.c.b16 %v935, %v933
    %v1062 = vpack.c.b16 %v938, %v936
    %v1063 = vpack.c.b16 %v939, %v937
    %v1064 = vpack.c.b16 %v942, %v940
    %v1065 = vpack.c.b16 %v943, %v941
    %v1066 = vpack.c.b16 %v946, %v944
    %v1067 = vpack.c.b16 %v947, %v945
    %v1068 = vpack.c.b16 %v950, %v948
    %v1069 = vpack.c.b16 %v951, %v949
    %v1070 = vpack.c.b16 %v954, %v952
    %v1071 = vpack.c.b16 %v955, %v953
    %v1072 = vpack.c.b16 %v958, %v956
    %v1073 = vpack.c.b16 %v959, %v957
    %v1074 = vpack.c.b16 %v962, %v960
    %v1075 = vpack.c.b16 %v963, %v961
    %v1076 = vpack.c.b16 %v966, %v964
    %v1077 = vpack.c.b16 %v967, %v965
    %v1078 = vpack.c.b16 %v970, %v968
    %v1079 = vpack.c.b16 %v971, %v969
    %v1080 = vpack.c.b16 %v974, %v972
    %v1081 = vpack.c.b16 %v975, %v973
    %v1082 = vpack.c.b16 %v978, %v976
    %v1083 = vpack.c.b16 %v979, %v977
    %v1084 = vpack.c.b16 %v982, %v980
    %v1085 = vpack.c.b16 %v983, %v981
    %v1086 = vpack.c.b16 %v986, %v984
    %v1087 = vpack.c.b16 %v987, %v985
    %v1088 = vpack.c.b16 %v990, %v988
    %v1089 = vpack.c.b16 %v991, %v989
    %v1090 = vpack.c.b16 %v994, %v992
    %v1091 = vpack.c.b16 %v995, %v993
    %v1092 = vpack.c.b16 %v998, %v996
    %v1093 = vpack.c.b16 %v999, %v997
    %v1094 = vpack.c.b16 %v1002, %v1000
    %v1095 = vpack.c.b16 %v1003, %v1001
    %v1096 = vpack.c.b16 %v1006, %v1004
    %v1097 = vpack.c.b16 %v1007, %v1005
    %v1098 = vpack.c.b16 %v1010, %v1008
    %v1099 = vpack.c.b16 %v1011, %v1009
    %v1100 = vpack.c.b16 %v1014, %v1012
    %v1101 = vpack.c.b16 %v1015, %v1013
    %v1102 = vpack.c.b16 %v1018, %v1016
    %v1103 = vpack.c.b16 %v1019, %v1017
    %v1104 = vpack.c.b16 %v1022, %v1020
    %v1105 = vpack.c.b16 %v1023, %v1021
    %v1106 = vpack.c.b16 %v1026, %v1024
    %v1107 = vpack.c.b16 %v1027, %v1025
    %v1108 = vpack.c.b16 %v1030, %v1028
    %v1109 = vpack.c.b16 %v1031, %v1029
    %v1110 = vpack.c.b16 %v1034, %v1032
    %v1111 = vpack.c.b16 %v1035, %v1033
    %v1112 = vpack.c.b16 %v1038, %v1036
    %v1113 = vpack.c.b16 %v1039, %v1037
    %v1114 = vpack.c.b16 %v1042, %v1040
    %v1115 = vpack.c.b16 %v1043, %v1041
    %v1116 = vpack.c.b16 %v1046, %v1044
    %v1117 = vpack.c.b16 %v1047, %v1045
    %v1118 = vpack.c.b16 %v1050, %v1048
    %v1119 = vpack.c.b16 %v1051, %v1049
    %v1120 = vpack.c.b16 %v1054, %v1052
    %v1121 = vpack.c.b16 %v1055, %v1053
    %v1122 = vpack.c.b16 %v1058, %v1056
    %v1123 = vpack.c.b16 %v1059, %v1057
    %1188 = vmatpush.bf16.msra.mxu0 %v1074
    %1189 = vmatpush.bf16.msra.mxu0 %v1072
    %1190 = vmatpush.bf16.msra.mxu0 %v1070
    %1191 = vmatpush.bf16.msra.mxu0 %v1068
    %1192 = vmatpush.bf16.msra.mxu0 %v1066
    %1193 = vmatpush.bf16.msra.mxu0 %v1064
    %1194 = vmatpush.bf16.msra.mxu0 %v1062
    %1195 = vmatpush.bf16.msra.mxu0 %v1060
    %1196 = vmatmul.bf16.gmra.mxu0 %v794
    %v1197 = vpop.f32.mrf.mxu0
    %v1198 = vadd.f32 %v864, %v1197
    %v1199 = vpop.f32.mrf.mxu0
    %1200 = vdwg.mxu0
    %1201 = vmatpush.bf16.msra.mxu0 %v1090
    %1202 = vmatpush.bf16.msra.mxu0 %v1088
    %1203 = vmatpush.bf16.msra.mxu0 %v1086
    %1204 = vmatpush.bf16.msra.mxu0 %v1084
    %1205 = vmatpush.bf16.msra.mxu0 %v1082
    %1206 = vmatpush.bf16.msra.mxu0 %v1080
    %1207 = vmatpush.bf16.msra.mxu0 %v1078
    %1208 = vmatpush.bf16.msra.mxu0 %v1076
    %1209 = vmatmul.bf16.gmra.mxu0 %v795
    %v1210 = vpop.f32.mrf.mxu0
    %v1211 = vadd.f32 %v1198, %v1210
    %v1212 = vpop.f32.mrf.mxu0
    %1213 = vdwg.mxu0
    %1214 = vmatpush.bf16.msra.mxu0 %v1106
    %1215 = vmatpush.bf16.msra.mxu0 %v1104
    %1216 = vmatpush.bf16.msra.mxu0 %v1102
    %1217 = vmatpush.bf16.msra.mxu0 %v1100
    %1218 = vmatpush.bf16.msra.mxu0 %v1098
    %1219 = vmatpush.bf16.msra.mxu0 %v1096
    %1220 = vmatpush.bf16.msra.mxu0 %v1094
    %1221 = vmatpush.bf16.msra.mxu0 %v1092
    %1222 = vmatmul.bf16.gmra.mxu0 %v796
    %v1223 = vpop.f32.mrf.mxu0
    %v1224 = vadd.f32 %v1211, %v1223
    %v1225 = vpop.f32.mrf.mxu0
    %1226 = vdwg.mxu0
    %1227 = vmatpush.bf16.msra.mxu0 %v1122
    %1228 = vmatpush.bf16.msra.mxu0 %v1120
    %1229 = vmatpush.bf16.msra.mxu0 %v1118
    %1230 = vmatpush.bf16.msra.mxu0 %v1116
    %1231 = vmatpush.bf16.msra.mxu0 %v1114
    %1232 = vmatpush.bf16.msra.mxu0 %v1112
    %1233 = vmatpush.bf16.msra.mxu0 %v1110
    %1234 = vmatpush.bf16.msra.mxu0 %v1108
    %1235 = vmatmul.bf16.gmra.mxu0 %v797
    %v1236 = vpop.f32.mrf.mxu0
    %v1237 = vadd.f32 %v1224, %v1236
    %v1238 = vpop.f32.mrf.mxu0
    %1239 = vdwg.mxu0
    %1240 = vmatpush.bf16.msra.mxu0 %v1075
    %1241 = vmatpush.bf16.msra.mxu0 %v1073
    %1242 = vmatpush.bf16.msra.mxu0 %v1071
    %1243 = vmatpush.bf16.msra.mxu0 %v1069
    %1244 = vmatpush.bf16.msra.mxu0 %v1067
    %1245 = vmatpush.bf16.msra.mxu0 %v1065
    %1246 = vmatpush.bf16.msra.mxu0 %v1063
    %1247 = vmatpush.bf16.msra.mxu0 %v1061
    %1248 = vmatmul.bf16.gmra.mxu0 %v794
    %v1249 = vpop.f32.mrf.mxu0
    %v1250 = vadd.f32 %v865, %v1249
    %v1251 = vpop.f32.mrf.mxu0
    %1252 = vdwg.mxu0
    %1253 = vmatpush.bf16.msra.mxu0 %v1091
    %1254 = vmatpush.bf16.msra.mxu0 %v1089
    %1255 = vmatpush.bf16.msra.mxu0 %v1087
    %1256 = vmatpush.bf16.msra.mxu0 %v1085
    %1257 = vmatpush.bf16.msra.mxu0 %v1083
    %1258 = vmatpush.bf16.msra.mxu0 %v1081
    %1259 = vmatpush.bf16.msra.mxu0 %v1079
    %1260 = vmatpush.bf16.msra.mxu0 %v1077
    %1261 = vmatmul.bf16.gmra.mxu0 %v795
    %v1262 = vpop.f32.mrf.mxu0
    %v1263 = vadd.f32 %v1250, %v1262
    %v1264 = vpop.f32.mrf.mxu0
    %1265 = vdwg.mxu0
    %1266 = vmatpush.bf16.msra.mxu0 %v1107
    %1267 = vmatpush.bf16.msra.mxu0 %v1105
    %1268 = vmatpush.bf16.msra.mxu0 %v1103
    %1269 = vmatpush.bf16.msra.mxu0 %v1101
    %1270 = vmatpush.bf16.msra.mxu0 %v1099
    %1271 = vmatpush.bf16.msra.mxu0 %v1097
    %1272 = vmatpush.bf16.msra.mxu0 %v1095
    %1273 = vmatpush.bf16.msra.mxu0 %v1093
    %1274 = vmatmul.bf16.gmra.mxu0 %v796
    %v1275 = vpop.f32.mrf.mxu0
    %v1276 = vadd.f32 %v1263, %v1275
    %v1277 = vpop.f32.mrf.mxu0
    %1278 = vdwg.mxu0
    %1279 = vmatpush.bf16.msra.mxu0 %v1123
    %1280 = vmatpush.bf16.msra.mxu0 %v1121
    %1281 = vmatpush.bf16.msra.mxu0 %v1119
    %1282 = vmatpush.bf16.msra.mxu0 %v1117
    %1283 = vmatpush.bf16.msra.mxu0 %v1115
    %1284 = vmatpush.bf16.msra.mxu0 %v1113
    %1285 = vmatpush.bf16.msra.mxu0 %v1111
    %1286 = vmatpush.bf16.msra.mxu0 %v1109
    %1287 = vmatmul.bf16.gmra.mxu0 %v797
    %v1288 = vpop.f32.mrf.mxu0
    %v1289 = vadd.f32 %v1276, %v1288
    %v1290 = vpop.f32.mrf.mxu0
    %1291 = vdwg.mxu0
    %v1292 = vmax.f32 %v1237, 0.0
    %v1293 = vmax.f32 %v1289, 0.0
    %v1294 = vpack.c.bf16 %v1292, %v1292
    %v1295 = vpack.c.bf16 %v1293, %v1293
    %v1296 = vld [vmem:[#allocation13] sm:$0xf]
    %v1297 = vld [vmem:[#allocation13 + $0x4] sm:$0xf]
    %v1298 = vld [vmem:[#allocation13 + $0x8] sm:$0xf]
    %v1299 = vld [vmem:[#allocation13 + $0xc] sm:$0xf]
    %v1300 = vld [vmem:[#allocation13 + $0x10] sm:$0xf]
    %v1301 = vld [vmem:[#allocation13 + $0x14] sm:$0xf]
    %v1302 = vld [vmem:[#allocation13 + $0x18] sm:$0xf]
    %v1303 = vld [vmem:[#allocation13 + $0x1c] sm:$0xf]
    %v1304 = vld [vmem:[#allocation13 + $0x20] sm:$0xf]
    %v1305 = vld [vmem:[#allocation13 + $0x24] sm:$0xf]
    %v1306 = vld [vmem:[#allocation13 + $0x28] sm:$0xf]
    %v1307 = vld [vmem:[#allocation13 + $0x2c] sm:$0xf]
    %v1308 = vld [vmem:[#allocation13 + $0x30] sm:$0xf]
    %v1309 = vld [vmem:[#allocation13 + $0x34] sm:$0xf]
    %v1310 = vld [vmem:[#allocation13 + $0x38] sm:$0xf]
    %v1311 = vld [vmem:[#allocation13 + $0x3c] sm:$0xf]
    %v1312 = vld [vmem:[#allocation13 + $0x40] sm:$0xf]
    %v1313 = vld [vmem:[#allocation13 + $0x44] sm:$0xf]
    %v1314 = vld [vmem:[#allocation13 + $0x48] sm:$0xf]
    %v1315 = vld [vmem:[#allocation13 + $0x4c] sm:$0xf]
    %v1316 = vld [vmem:[#allocation13 + $0x50] sm:$0xf]
    %v1317 = vld [vmem:[#allocation13 + $0x54] sm:$0xf]
    %v1318 = vld [vmem:[#allocation13 + $0x58] sm:$0xf]
    %v1319 = vld [vmem:[#allocation13 + $0x5c] sm:$0xf]
    %v1320 = vld [vmem:[#allocation13 + $0x60] sm:$0xf]
    %v1321 = vld [vmem:[#allocation13 + $0x64] sm:$0xf]
    %v1322 = vld [vmem:[#allocation13 + $0x68] sm:$0xf]
    %v1323 = vld [vmem:[#allocation13 + $0x6c] sm:$0xf]
    %v1324 = vld [vmem:[#allocation13 + $0x70] sm:$0xf]
    %v1325 = vld [vmem:[#allocation13 + $0x74] sm:$0xf]
    %v1326 = vld [vmem:[#allocation13 + $0x78] sm:$0xf]
    %v1327 = vld [vmem:[#allocation13 + $0x7c] sm:$0xf]
    %v1328 = vld [vmem:[%s8] sm:$0x1]
    %v1330 = vperm.slane %v1328, 0
    %v1364 = vunpack.c.l.b16 %v1296
    %v1365 = vunpack.c.l.b16 %v1297
    %v1366 = vunpack.c.l.b16 %v1298
    %v1367 = vunpack.c.l.b16 %v1299
    %v1368 = vunpack.c.l.b16 %v1300
    %v1369 = vunpack.c.l.b16 %v1301
    %v1370 = vunpack.c.l.b16 %v1302
    %v1371 = vunpack.c.l.b16 %v1303
    %v1372 = vunpack.c.l.b16 %v1304
    %v1373 = vunpack.c.l.b16 %v1305
    %v1374 = vunpack.c.l.b16 %v1306
    %v1375 = vunpack.c.l.b16 %v1307
    %v1376 = vunpack.c.l.b16 %v1308
    %v1377 = vunpack.c.l.b16 %v1309
    %v1378 = vunpack.c.l.b16 %v1310
    %v1379 = vunpack.c.l.b16 %v1311
    %v1380 = vunpack.c.l.b16 %v1312
    %v1381 = vunpack.c.l.b16 %v1313
    %v1382 = vunpack.c.l.b16 %v1314
    %v1383 = vunpack.c.l.b16 %v1315
    %v1384 = vunpack.c.l.b16 %v1316
    %v1385 = vunpack.c.l.b16 %v1317
    %v1386 = vunpack.c.l.b16 %v1318
    %v1387 = vunpack.c.l.b16 %v1319
    %v1388 = vunpack.c.l.b16 %v1320
    %v1389 = vunpack.c.l.b16 %v1321
    %v1390 = vunpack.c.l.b16 %v1322
    %v1391 = vunpack.c.l.b16 %v1323
    %v1392 = vunpack.c.l.b16 %v1324
    %v1393 = vunpack.c.l.b16 %v1325
    %v1394 = vunpack.c.l.b16 %v1326
    %v1395 = vunpack.c.l.b16 %v1327
    %v1396 = vpack.c.b16 %v1365, %v1364
    %v1397 = vpack.c.b16 %v1367, %v1366
    %v1398 = vpack.c.b16 %v1369, %v1368
    %v1399 = vpack.c.b16 %v1371, %v1370
    %v1400 = vpack.c.b16 %v1373, %v1372
    %v1401 = vpack.c.b16 %v1375, %v1374
    %v1402 = vpack.c.b16 %v1377, %v1376
    %v1403 = vpack.c.b16 %v1379, %v1378
    %v1404 = vpack.c.b16 %v1381, %v1380
    %v1405 = vpack.c.b16 %v1383, %v1382
    %v1406 = vpack.c.b16 %v1385, %v1384
    %v1407 = vpack.c.b16 %v1387, %v1386
    %v1408 = vpack.c.b16 %v1389, %v1388
    %v1409 = vpack.c.b16 %v1391, %v1390
    %v1410 = vpack.c.b16 %v1393, %v1392
    %v1411 = vpack.c.b16 %v1395, %v1394
    %1428 = vmatpush.bf16.msra.mxu0 %v1403
    %1429 = vmatpush.bf16.msra.mxu0 %v1402
    %1430 = vmatpush.bf16.msra.mxu0 %v1401
    %1431 = vmatpush.bf16.msra.mxu0 %v1400
    %1432 = vmatpush.bf16.msra.mxu0 %v1399
    %1433 = vmatpush.bf16.msra.mxu0 %v1398
    %1434 = vmatpush.bf16.msra.mxu0 %v1397
    %1435 = vmatpush.bf16.msra.mxu0 %v1396
    %1436 = vmatmul.bf16.gmra.mxu0 %v1294
    %v1437 = vpop.f32.mrf.mxu0
    %v1438 = vadd.f32 %v1330, %v1437
    %v1439 = vpop.f32.mrf.mxu0
    %1440 = vdwg.mxu0
    %1441 = vmatpush.bf16.msra.mxu0 %v1411
    %1442 = vmatpush.bf16.msra.mxu0 %v1410
    %1443 = vmatpush.bf16.msra.mxu0 %v1409
    %1444 = vmatpush.bf16.msra.mxu0 %v1408
    %1445 = vmatpush.bf16.msra.mxu0 %v1407
    %1446 = vmatpush.bf16.msra.mxu0 %v1406
    %1447 = vmatpush.bf16.msra.mxu0 %v1405
    %1448 = vmatpush.bf16.msra.mxu0 %v1404
    %1449 = vmatmul.bf16.gmra.mxu0 %v1295
    %v1450 = vpop.f32.mrf.mxu0
    %v1451 = vadd.f32 %v1438, %v1450
    %v1452 = vpop.f32.mrf.mxu0
    %1453 = vdwg.mxu0
    %v1454 = vmax.f32 %v1451, 0.0
    %v1455 = vpack.c.bf16 %v1454, %v1454
    %v1456 = vld [vmem:[#allocation14] sm:$0xf]
    %v1457 = vld [vmem:[#allocation14 + $0x4] sm:$0xf]
    %v1458 = vld [vmem:[#allocation14 + $0x8] sm:$0xf]
    %v1459 = vld [vmem:[#allocation14 + $0xc] sm:$0xf]
    %v1460 = vld [vmem:[#allocation14 + $0x10] sm:$0xf]
    %v1461 = vld [vmem:[#allocation14 + $0x14] sm:$0xf]
    %v1462 = vld [vmem:[#allocation14 + $0x18] sm:$0xf]
    %v1463 = vld [vmem:[#allocation14 + $0x1c] sm:$0xf]
    %v1464 = vld [vmem:[#allocation14 + $0x20] sm:$0xf]
    %v1465 = vld [vmem:[#allocation14 + $0x24] sm:$0xf]
    %v1466 = vld [vmem:[#allocation14 + $0x28] sm:$0xf]
    %v1467 = vld [vmem:[#allocation14 + $0x2c] sm:$0xf]
    %v1468 = vld [vmem:[#allocation14 + $0x30] sm:$0xf]
    %v1469 = vld [vmem:[#allocation14 + $0x34] sm:$0xf]
    %v1470 = vld [vmem:[#allocation14 + $0x38] sm:$0xf]
    %v1471 = vld [vmem:[#allocation14 + $0x3c] sm:$0xf]
    %v1472 = vld [vmem:[%s10] sm:$0x1]
    %v1474 = vperm.slane %v1472, 0
    %v1492 = vunpack.c.l.b16 %v1456
    %v1493 = vunpack.c.l.b16 %v1457
    %v1494 = vunpack.c.l.b16 %v1458
    %v1495 = vunpack.c.l.b16 %v1459
    %v1496 = vunpack.c.l.b16 %v1460
    %v1497 = vunpack.c.l.b16 %v1461
    %v1498 = vunpack.c.l.b16 %v1462
    %v1499 = vunpack.c.l.b16 %v1463
    %v1500 = vunpack.c.l.b16 %v1464
    %v1501 = vunpack.c.l.b16 %v1465
    %v1502 = vunpack.c.l.b16 %v1466
    %v1503 = vunpack.c.l.b16 %v1467
    %v1504 = vunpack.c.l.b16 %v1468
    %v1505 = vunpack.c.l.b16 %v1469
    %v1506 = vunpack.c.l.b16 %v1470
    %v1507 = vunpack.c.l.b16 %v1471
    %v1508 = vpack.c.b16 %v1493, %v1492
    %v1509 = vpack.c.b16 %v1495, %v1494
    %v1510 = vpack.c.b16 %v1497, %v1496
    %v1511 = vpack.c.b16 %v1499, %v1498
    %v1512 = vpack.c.b16 %v1501, %v1500
    %v1513 = vpack.c.b16 %v1503, %v1502
    %v1514 = vpack.c.b16 %v1505, %v1504
    %v1515 = vpack.c.b16 %v1507, %v1506
    %1524 = vmatpush.bf16.msra.mxu0 %v1515
    %1525 = vmatpush.bf16.msra.mxu0 %v1514
    %1526 = vmatpush.bf16.msra.mxu0 %v1513
    %1527 = vmatpush.bf16.msra.mxu0 %v1512
    %1528 = vmatpush.bf16.msra.mxu0 %v1511
    %1529 = vmatpush.bf16.msra.mxu0 %v1510
    %1530 = vmatpush.bf16.msra.mxu0 %v1509
    %1531 = vmatpush.bf16.msra.mxu0 %v1508
    %1532 = vmatmul.bf16.gmra.mxu0 %v1455
    %v1533 = vpop.f32.mrf.mxu0
    %v1534 = vadd.f32 %v1474, %v1533
    %v1535 = vpop.f32.mrf.mxu0
    %1536 = vdwg.mxu0
    %v1537 = vxor.u32 %v1534, 2147483648
    %v1538 = vmul.f32 %v1537, 1.442695
    %v1539 = vpow.pop %v1538
    %v1540 = vadd.f32 %v1539, 1.0
    %v1541 = vrcp.pop %v1540
    %v1542 = vmul.f32 %v1540, %v1541
    %v1543 = vsub.f32 1.0, %v1542
    %v1544 = vmul.f32 %v1541, %v1543
    %v1545 = vadd.f32 %v1541, %v1544
    %vm1546 = vweird.f32 %v1540
    %vm1547 = vweird.f32 %v1541
    %vm1548 = vmor %vm1546, %vm1547
    %v1549 = vsel %vm1548, %v1541, %v1545
    %v1550 = vand.u32 2147483647, %v1540
    %vm1551 = vcmp.eq.f32.partialorder %v1550, 8.507059e+37
    %v1552 = vand.u32 %v1540, 2147483648
    %v1553 = vor.u32 1.1754944e-38, %v1552
    %v1554 = vsel %vm1551, %v1553, %v1549
    %v1555 = vmul.f32 1.0, %v1554
    %1556 = vst [vmem:[#allocation16] sm:$0xff] %v1555
    // Predicated region
    $region78: #{tpu_custom_call.1} parent=1 // pred_check
      _
    $region79: #{tpu_custom_call.1} parent=1 // pred_check_branch
      %1558 = sbr.rel (0) target = $region81
    $region80: #{tpu_custom_call.1} parent=1 // pred_region
      %1560 = vsyncadd [#allocation4], 0
      %s1562 = sshll.u32 [#allocation16], 4
      %s1563 = int_to_ptr.vmem [resolvable:$true] %s1562
      %s1564 = sshll.u32 %s11, 4
      %s1565 = int_to_ptr.hbm [resolvable:$true] %s1564
      %1567 = dma.vmem_to_hbm [thread:$0]  %s1563, 128, %s1565, [#allocation4]
    $region81: #{tpu_custom_call.1} parent=1 // pred_fallthru
      _
    // Predicated region
    $region82: #{tpu_custom_call.1} parent=1 // pred_check
      _
    $region83: #{tpu_custom_call.1} parent=1 // pred_check_branch
      %1569 = sbr.rel (0) target = $region85
    $region84: #{tpu_custom_call.1} parent=1 // pred_region
      %1571 = dma.done [#allocation4], 128
    $region85: #{tpu_custom_call.1} parent=1 // pred_fallthru
      _
    %1572 = vsyncpa [#allocation3], 1
    %1573 = vsyncpa [#allocation6], 1
    %1574 = vsyncpa [#allocation9], 1
    %1575 = vsyncpa [#allocation12], 1
    %1576 = vsyncpa [#allocation15], 1
    %1577 = vsyncpa [#allocation4], 1

</llo_original>
